<compile_context>
chip_gen: v5e
topology: v5e:2x2
jax: 0.10.0
libtpu: 0.0.40
codegen_flags: <defaults>
</compile_context>

<pallas_src>
import jax
import jax.numpy as jnp
from jax.experimental import pallas as pl
from jax.experimental.pallas import tpu as pltpu

F1_PAD = 32    # conv1 im2col columns: 1*5*5  = 25  -> 32
F2_PAD = 256   # conv2 im2col columns: 10*5*5 = 250 -> 256
H_PAD = 64     # fc1 hidden: 50 -> 64 (padded units are exactly 0 through relu)


# ----------------------------- Pallas kernels ------------------------------

def conv_pool_relu_kernel(p_ref, w_ref, b_ref, o_ref):
    # p_ref: (4, TM, Fp) bf16 -- leading 4 = taps of the 2x2 max-pool window.
    # w_ref: (Fp, Cout) bf16, b_ref: (1, Cout) f32, o_ref: (TM, Cout) bf16.
    four, tm, fp = p_ref.shape
    # One MXU stream over all 4 taps (leading-dim merge; layout-trivial since
    # TM is a multiple of 8).
    p = p_ref[...].reshape(four * tm, fp)
    y = jnp.dot(p, w_ref[...], preferred_element_type=jnp.float32)
    y = y.reshape(four, tm, y.shape[-1])
    y = jnp.max(y, axis=0) + b_ref[...]            # pool over taps, bias in f32
    o_ref[...] = jnp.maximum(y, 0.0).astype(o_ref.dtype)


def mlp_logsoftmax_kernel(x_ref, w1_ref, b1_ref, w2_ref, b2_ref, o_ref):
    # x: (TN, 320) bf16; w1: (320, Hp) bf16; w2: (Hp, 10) bf16; biases f32.
    h = jnp.dot(x_ref[...], w1_ref[...], preferred_element_type=jnp.float32)
    h = jnp.maximum(h + b1_ref[...], 0.0).astype(w2_ref.dtype)
    logits = jnp.dot(h, w2_ref[...], preferred_element_type=jnp.float32) + b2_ref[...]
    m = jnp.max(logits, axis=-1, keepdims=True)
    s = logits - m
    lse = jnp.log(jnp.sum(jnp.exp(s), axis=-1, keepdims=True))
    o_ref[...] = s - lse


# ----------------------------- tiling helpers -------------------------------

def _pick_images_per_tile(n_images, rows_per_image, max_rows=1152):
    """Whole images per grid step. rows_per_image is a multiple of 8, so any
    whole-image tile satisfies the sublane constraint. Prefer the largest tile
    under max_rows that still leaves >= 2 grid steps (pipelining / megacore)."""
    divisors = [d for d in range(1, n_images + 1) if n_images % d == 0]
    fitting = [d for d in divisors if d * rows_per_image <= max_rows] or [1]
    multi = [d for d in fitting if n_images // d >= 2]
    return max(multi) if multi else max(fitting)


def _pick_row_tile(n, max_rows=1024):
    """Largest multiple-of-8 divisor of n that is <= max_rows; prefer leaving
    >= 2 grid steps. Tiny n falls back to the full extent (block == array)."""
    cands = [d for d in range(8, min(n, max_rows) + 1, 8) if n % d == 0]
    if not cands:
        return n
    multi = [d for d in cands if n // d >= 2]
    return max(multi) if multi else max(cands)


# ----------------------------- pallas_call wrappers --------------------------

def conv_pool_relu(patches, w_mat, b, *, rows_per_image, n_images):
    four, M, Fp = patches.shape
    assert M == rows_per_image * n_images
    Cout = w_mat.shape[1]
    ipt = _pick_images_per_tile(n_images, rows_per_image)
    tm = ipt * rows_per_image
    grid = (M // tm,)
    return pl.pallas_call(
        conv_pool_relu_kernel,
        out_shape=jax.ShapeDtypeStruct((M, Cout), jnp.bfloat16),
        grid_spec=pltpu.PrefetchScalarGridSpec(
            num_scalar_prefetch=0,
            grid=grid,
            in_specs=[pl.BlockSpec((four, tm, Fp), lambda i: (0, i, 0)),
                      pl.BlockSpec((Fp, Cout), lambda i: (0, 0)),
                      pl.BlockSpec((1, Cout), lambda i: (0, 0))],
            out_specs=pl.BlockSpec((tm, Cout), lambda i: (i, 0)),
        ),
        compiler_params=pltpu.CompilerParams(
            dimension_semantics=("parallel",)),
    )(patches, w_mat, b.reshape(1, Cout))


def mlp_logsoftmax(flat, w1, b1, w2, b2):
    N, D = flat.shape
    Hp = w1.shape[1]
    O = w2.shape[1]
    tn = _pick_row_tile(N)
    grid = (N // tn,)
    return pl.pallas_call(
        mlp_logsoftmax_kernel,
        out_shape=jax.ShapeDtypeStruct((N, O), jnp.float32),
        grid_spec=pltpu.PrefetchScalarGridSpec(
            num_scalar_prefetch=0,
            grid=grid,
            in_specs=[pl.BlockSpec((tn, D), lambda i: (i, 0)),
                      pl.BlockSpec((D, Hp), lambda i: (0, 0)),
                      pl.BlockSpec((1, Hp), lambda i: (0, 0)),
                      pl.BlockSpec((Hp, O), lambda i: (0, 0)),
                      pl.BlockSpec((1, O), lambda i: (0, 0))],
            out_specs=pl.BlockSpec((tn, O), lambda i: (i, 0)),
        ),
        compiler_params=pltpu.CompilerParams(
            dimension_semantics=("parallel",)),
    )(flat.astype(jnp.bfloat16), w1, b1.reshape(1, Hp), w2, b2.reshape(1, O))


# ------------------------------ JAX glue (indexing only) ---------------------

def im2col_pool_patches_nhwc(x, K, pool=2, f_pad=None):
    """x: (N, H, W, C) NHWC. Valid conv with kernel K followed by 2x2 max-pool.

    Returns bf16 patches of shape (pool*pool, N*Ph*Pw, f_pad) where the
    leading axis enumerates the (dy, dx) pool-window tap, rows are in
    (n, ph, pw) order and columns in (ky, kx, c) order (matching the
    NHWC-permuted conv weight). Pure slicing/stacking, no FLOPs.
    """
    x = x.astype(jnp.bfloat16)
    N, H, W, C = x.shape
    Hc, Wc = H - K + 1, W - K + 1
    Ph, Pw = Hc // pool, Wc // pool
    pos = []
    for dy in range(pool):
        for dx in range(pool):
            taps = []
            for ky in range(K):
                for kx in range(K):
                    sl = x[:, dy + ky: dy + ky + pool * Ph: pool,
                              dx + kx: dx + kx + pool * Pw: pool, :]  # (N,Ph,Pw,C)
                    taps.append(sl)
            patch = jnp.stack(taps, axis=3)                  # (N, Ph, Pw, K*K, C)
            pos.append(patch.reshape(N * Ph * Pw, K * K * C))
    p = jnp.stack(pos, axis=0)                               # (4, M, K*K*C)
    if f_pad is not None and f_pad > K * K * C:
        p = jnp.pad(p, ((0, 0), (0, 0), (0, f_pad - K * K * C)))
    return p, (Ph, Pw)


def prepare_params(params):
    """Offline re-layout of PyTorch-style params for the NHWC/padded kernels."""
    def conv_w(w, f_pad):
        cout, cin, k, _ = w.shape
        # (Cout,Cin,K,K) -> rows in (ky,kx,c) order, zero-padded to f_pad.
        m = jnp.transpose(w, (2, 3, 1, 0)).reshape(k * k * cin, cout)
        return jnp.pad(m, ((0, f_pad - k * k * cin), (0, 0))).astype(jnp.bfloat16)

    p = {}
    p["conv1_w"] = conv_w(params["conv1_w"], F1_PAD)
    p["conv1_b"] = params["conv1_b"].astype(jnp.float32)
    p["conv2_w"] = conv_w(params["conv2_w"], F2_PAD)
    p["conv2_b"] = params["conv2_b"].astype(jnp.float32)
    # fc1: torch flattens NCHW (c,h,w); our NHWC flatten is (h,w,c) -> permute
    # columns offline, transpose for right-multiply, pad hidden 50 -> H_PAD.
    w1 = params["fc1_w"].reshape(50, 20, 4, 4).transpose(0, 2, 3, 1).reshape(50, 320).T
    p["fc1_w"] = jnp.pad(w1, ((0, 0), (0, H_PAD - 50))).astype(jnp.bfloat16)
    p["fc1_b"] = jnp.pad(params["fc1_b"], (0, H_PAD - 50)).astype(jnp.float32)
    p["fc2_w"] = jnp.pad(params["fc2_w"].T, ((0, H_PAD - 50), (0, 0))).astype(jnp.bfloat16)
    p["fc2_b"] = params["fc2_b"].astype(jnp.float32)
    return p


def npu_mnist_forward(x, prepped):
    """x: (N, 1, 28, 28) float32 NCHW -> (N, 10) log-probabilities."""
    N = x.shape[0]
    x = jnp.transpose(x, (0, 2, 3, 1))                       # NHWC once (C=1)

    # conv1 (1->10, k=5) -> maxpool2 -> relu
    p1, (P1h, P1w) = im2col_pool_patches_nhwc(x, 5, f_pad=F1_PAD)
    y1 = conv_pool_relu(p1, prepped["conv1_w"], prepped["conv1_b"],
                        rows_per_image=P1h * P1w, n_images=N)   # (N*144, 10)
    y1 = y1.reshape(N, P1h, P1w, 10)                            # NHWC, no transpose

    # conv2 (10->20, k=5) -> maxpool2 -> relu
    p2, (P2h, P2w) = im2col_pool_patches_nhwc(y1, 5, f_pad=F2_PAD)
    y2 = conv_pool_relu(p2, prepped["conv2_w"], prepped["conv2_b"],
                        rows_per_image=P2h * P2w, n_images=N)   # (N*16, 20)

    # (h, w, c) flatten -- matches the offline-permuted fc1 weight.
    flat = y2.reshape(N, P2h * P2w * 20)                        # (N, 320)

    # fc1 -> relu -> fc2 -> log_softmax, fused.
    return mlp_logsoftmax(flat, prepped["fc1_w"], prepped["fc1_b"],
                          prepped["fc2_w"], prepped["fc2_b"])


# ------------------------------ reference (pure JAX, f32) --------------------

def reference_forward(x, params):
    def conv2d(x, w, b):
        y = jax.lax.conv_general_dilated(
            x, w, window_strides=(1, 1), padding="VALID",
            dimension_numbers=("NCHW", "OIHW", "NCHW"))
        return y + b[None, :, None, None]

    def maxpool2(x):
        return jax.lax.reduce_window(x, -jnp.inf, jax.lax.max,
                                     (1, 1, 2, 2), (1, 1, 2, 2), "VALID")

    y = jnp.maximum(maxpool2(conv2d(x, params["conv1_w"], params["conv1_b"])), 0.0)
    y = jnp.maximum(maxpool2(conv2d(y, params["conv2_w"], params["conv2_b"])), 0.0)
    y = y.reshape(y.shape[0], -1)
    y = jnp.maximum(y @ params["fc1_w"].T + params["fc1_b"], 0.0)
    y = y @ params["fc2_w"].T + params["fc2_b"]
    return jax.nn.log_softmax(y, axis=1)


# ------------------------------ main ----------------------------------------

if __name__ == "__main__":
    key = jax.random.PRNGKey(0)
    keys = jax.random.split(key, 9)

    params = {
        "conv1_w": 0.1 * jax.random.normal(keys[0], (10, 1, 5, 5), jnp.float32),
        "conv1_b": 0.1 * jax.random.normal(keys[1], (10,), jnp.float32),
        "conv2_w": 0.1 * jax.random.normal(keys[2], (20, 10, 5, 5), jnp.float32),
        "conv2_b": 0.1 * jax.random.normal(keys[3], (20,), jnp.float32),
        "fc1_w": 0.1 * jax.random.normal(keys[4], (50, 320), jnp.float32),
        "fc1_b": 0.1 * jax.random.normal(keys[5], (50,), jnp.float32),
        "fc2_w": 0.1 * jax.random.normal(keys[6], (10, 50), jnp.float32),
        "fc2_b": 0.1 * jax.random.normal(keys[7], (10,), jnp.float32),
    }

    # MNIST-shaped input (spatial dims are fixed by fc1's 320 = 20*4*4).
    x = jax.random.normal(keys[8], (2, 1, 28, 28), jnp.float32)

    prepped = prepare_params(params)
    fwd = jax.jit(npu_mnist_forward)
    out = jax.block_until_ready(fwd(x, prepped))

    assert out.shape == (2, 10) and out.dtype == jnp.float32
    ref = reference_forward(x, params)
    assert jnp.allclose(out, ref, atol=0.15, rtol=0.05), (
        "max abs err vs f32 reference: %f" % float(jnp.max(jnp.abs(out - ref))))

    print("KERNEL_OK")
</pallas_src>

<mosaic_0001>
module attributes {stable_mosaic.version = 11 : i64} {
  func.func @conv_pool_relu_kernel(%arg0: i32, %arg1: memref<4x144x32xbf16, #tpu.memory_space<vmem>>, %arg2: memref<32x10xbf16, #tpu.memory_space<vmem>>, %arg3: memref<1x10xf32, #tpu.memory_space<vmem>>, %arg4: memref<144x10xbf16, #tpu.memory_space<vmem>>) attributes {dimension_semantics = [#tpu.dimension_semantics<parallel>], iteration_bounds = array<i64: 2>, scalar_prefetch = 0 : i64, scratch_operands = 0 : i64, tpu.core_type = #tpu.core_type<tc>, window_params = [{transform_indices = @transform_0, window_bounds = array<i64: 4, 144, 32>}, {pipeline_mode = #tpu.pipeline_mode<synchronous>, transform_indices = @transform_1, window_bounds = array<i64: 32, 10>}, {pipeline_mode = #tpu.pipeline_mode<synchronous>, transform_indices = @transform_2, window_bounds = array<i64: 1, 10>}, {transform_indices = @transform_3, window_bounds = array<i64: 144, 10>}]} {
    %c0 = arith.constant 0 : index
    %c0_0 = arith.constant 0 : index
    %c0_1 = arith.constant 0 : index
    %0 = vector.load %arg1[%c0, %c0_0, %c0_1] : memref<4x144x32xbf16, #tpu.memory_space<vmem>>, vector<4x144x32xbf16>
    %1 = vector.shape_cast %0 : vector<4x144x32xbf16> to vector<576x32xbf16>
    %c0_2 = arith.constant 0 : index
    %c0_3 = arith.constant 0 : index
    %2 = vector.load %arg2[%c0_2, %c0_3] : memref<32x10xbf16, #tpu.memory_space<vmem>>, vector<32x10xbf16>
    %cst = arith.constant dense<0.000000e+00> : vector<576x10xf32>
    %3 = tpu.matmul %1, %2, %cst {dimension_numbers = #tpu.dot_dimension_numbers<[1], [0], [0], [1], [0, 0, 1, 1], [], []>} : vector<576x32xbf16>, vector<32x10xbf16>, vector<576x10xf32> -> vector<576x10xf32>
    %4 = vector.shape_cast %3 : vector<576x10xf32> to vector<4x144x10xf32>
    %cst_4 = arith.constant dense<0xFF800000> : vector<144x10xf32>
    %5 = vector.multi_reduction <maximumf>, %4, %cst_4 [0] : vector<4x144x10xf32> to vector<144x10xf32>
    %c0_5 = arith.constant 0 : index
    %c0_6 = arith.constant 0 : index
    %6 = vector.load %arg3[%c0_5, %c0_6] : memref<1x10xf32, #tpu.memory_space<vmem>>, vector<1x10xf32>
    %7 = vector.broadcast %6 : vector<1x10xf32> to vector<144x10xf32>
    %8 = arith.addf %5, %7 : vector<144x10xf32>
    %cst_7 = arith.constant 0.000000e+00 : f32
    %9 = vector.broadcast %cst_7 : f32 to vector<144x10xf32>
    %10 = arith.maximumf %8, %9 : vector<144x10xf32>
    %11 = arith.truncf %10 : vector<144x10xf32> to vector<144x10xbf16>
    %c0_8 = arith.constant 0 : index
    %c0_9 = arith.constant 0 : index
    %12 = vector.load %arg4[%c0_8, %c0_9] : memref<144x10xbf16, #tpu.memory_space<vmem>>, vector<144x10xbf16>
    tpu.vector_store %arg4[%c0_8, %c0_9], %11 {strides = array<i32>} : memref<144x10xbf16, #tpu.memory_space<vmem>>, vector<144x10xbf16>,
    return
  }
  func.func @transform_0(%arg0: i32) -> (i32, i32, i32) {
    %c0_i32 = arith.constant 0 : i32
    %c0_i32_0 = arith.constant 0 : i32
    %c0_i32_1 = arith.constant 0 : i32
    return %c0_i32, %arg0, %c0_i32_0 : i32, i32, i32
  }
  func.func @transform_1(%arg0: i32) -> (i32, i32) {
    %c0_i32 = arith.constant 0 : i32
    %c0_i32_0 = arith.constant 0 : i32
    %c0_i32_1 = arith.constant 0 : i32
    return %c0_i32, %c0_i32_0 : i32, i32
  }
  func.func @transform_2(%arg0: i32) -> (i32, i32) {
    %c0_i32 = arith.constant 0 : i32
    %c0_i32_0 = arith.constant 0 : i32
    %c0_i32_1 = arith.constant 0 : i32
    return %c0_i32, %c0_i32_0 : i32, i32
  }
  func.func @transform_3(%arg0: i32) -> (i32, i32) {
    %c0_i32 = arith.constant 0 : i32
    %c0_i32_0 = arith.constant 0 : i32
    return %arg0, %c0_i32 : i32, i32
  }
}

module attributes {stable_mosaic.version = 11 : i64} {
  func.func @conv_pool_relu_kernel(%arg0: i32, %arg1: memref<4x16x256xbf16, #tpu.memory_space<vmem>>, %arg2: memref<256x20xbf16, #tpu.memory_space<vmem>>, %arg3: memref<1x20xf32, #tpu.memory_space<vmem>>, %arg4: memref<16x20xbf16, #tpu.memory_space<vmem>>) attributes {dimension_semantics = [#tpu.dimension_semantics<parallel>], iteration_bounds = array<i64: 2>, scalar_prefetch = 0 : i64, scratch_operands = 0 : i64, tpu.core_type = #tpu.core_type<tc>, window_params = [{transform_indices = @transform_0, window_bounds = array<i64: 4, 16, 256>}, {pipeline_mode = #tpu.pipeline_mode<synchronous>, transform_indices = @transform_1, window_bounds = array<i64: 256, 20>}, {pipeline_mode = #tpu.pipeline_mode<synchronous>, transform_indices = @transform_2, window_bounds = array<i64: 1, 20>}, {transform_indices = @transform_3, window_bounds = array<i64: 16, 20>}]} {
    %c0 = arith.constant 0 : index
    %c0_0 = arith.constant 0 : index
    %c0_1 = arith.constant 0 : index
    %0 = vector.load %arg1[%c0, %c0_0, %c0_1] : memref<4x16x256xbf16, #tpu.memory_space<vmem>>, vector<4x16x256xbf16>
    %1 = vector.shape_cast %0 : vector<4x16x256xbf16> to vector<64x256xbf16>
    %c0_2 = arith.constant 0 : index
    %c0_3 = arith.constant 0 : index
    %2 = vector.load %arg2[%c0_2, %c0_3] : memref<256x20xbf16, #tpu.memory_space<vmem>>, vector<256x20xbf16>
    %cst = arith.constant dense<0.000000e+00> : vector<64x20xf32>
    %3 = tpu.matmul %1, %2, %cst {dimension_numbers = #tpu.dot_dimension_numbers<[1], [0], [0], [1], [0, 0, 1, 1], [], []>} : vector<64x256xbf16>, vector<256x20xbf16>, vector<64x20xf32> -> vector<64x20xf32>
    %4 = vector.shape_cast %3 : vector<64x20xf32> to vector<4x16x20xf32>
    %cst_4 = arith.constant dense<0xFF800000> : vector<16x20xf32>
    %5 = vector.multi_reduction <maximumf>, %4, %cst_4 [0] : vector<4x16x20xf32> to vector<16x20xf32>
    %c0_5 = arith.constant 0 : index
    %c0_6 = arith.constant 0 : index
    %6 = vector.load %arg3[%c0_5, %c0_6] : memref<1x20xf32, #tpu.memory_space<vmem>>, vector<1x20xf32>
    %7 = vector.broadcast %6 : vector<1x20xf32> to vector<16x20xf32>
    %8 = arith.addf %5, %7 : vector<16x20xf32>
    %cst_7 = arith.constant 0.000000e+00 : f32
    %9 = vector.broadcast %cst_7 : f32 to vector<16x20xf32>
    %10 = arith.maximumf %8, %9 : vector<16x20xf32>
    %11 = arith.truncf %10 : vector<16x20xf32> to vector<16x20xbf16>
    %c0_8 = arith.constant 0 : index
    %c0_9 = arith.constant 0 : index
    %12 = vector.load %arg4[%c0_8, %c0_9] : memref<16x20xbf16, #tpu.memory_space<vmem>>, vector<16x20xbf16>
    tpu.vector_store %arg4[%c0_8, %c0_9], %11 {strides = array<i32>} : memref<16x20xbf16, #tpu.memory_space<vmem>>, vector<16x20xbf16>,
    return
  }
  func.func @transform_0(%arg0: i32) -> (i32, i32, i32) {
    %c0_i32 = arith.constant 0 : i32
    %c0_i32_0 = arith.constant 0 : i32
    %c0_i32_1 = arith.constant 0 : i32
    return %c0_i32, %arg0, %c0_i32_0 : i32, i32, i32
  }
  func.func @transform_1(%arg0: i32) -> (i32, i32) {
    %c0_i32 = arith.constant 0 : i32
    %c0_i32_0 = arith.constant 0 : i32
    %c0_i32_1 = arith.constant 0 : i32
    return %c0_i32, %c0_i32_0 : i32, i32
  }
  func.func @transform_2(%arg0: i32) -> (i32, i32) {
    %c0_i32 = arith.constant 0 : i32
    %c0_i32_0 = arith.constant 0 : i32
    %c0_i32_1 = arith.constant 0 : i32
    return %c0_i32, %c0_i32_0 : i32, i32
  }
  func.func @transform_3(%arg0: i32) -> (i32, i32) {
    %c0_i32 = arith.constant 0 : i32
    %c0_i32_0 = arith.constant 0 : i32
    return %arg0, %c0_i32 : i32, i32
  }
}

module attributes {stable_mosaic.version = 11 : i64} {
  func.func @mlp_logsoftmax_kernel(%arg0: i32, %arg1: memref<2x320xbf16, #tpu.memory_space<vmem>>, %arg2: memref<320x64xbf16, #tpu.memory_space<vmem>>, %arg3: memref<1x64xf32, #tpu.memory_space<vmem>>, %arg4: memref<64x10xbf16, #tpu.memory_space<vmem>>, %arg5: memref<1x10xf32, #tpu.memory_space<vmem>>, %arg6: memref<2x10xf32, #tpu.memory_space<vmem>>) attributes {dimension_semantics = [#tpu.dimension_semantics<parallel>], iteration_bounds = array<i64: 1>, scalar_prefetch = 0 : i64, scratch_operands = 0 : i64, tpu.core_type = #tpu.core_type<tc>, window_params = [{transform_indices = @transform_0, window_bounds = array<i64: 2, 320>}, {pipeline_mode = #tpu.pipeline_mode<synchronous>, transform_indices = @transform_1, window_bounds = array<i64: 320, 64>}, {pipeline_mode = #tpu.pipeline_mode<synchronous>, transform_indices = @transform_2, window_bounds = array<i64: 1, 64>}, {pipeline_mode = #tpu.pipeline_mode<synchronous>, transform_indices = @transform_3, window_bounds = array<i64: 64, 10>}, {pipeline_mode = #tpu.pipeline_mode<synchronous>, transform_indices = @transform_4, window_bounds = array<i64: 1, 10>}, {transform_indices = @transform_5, window_bounds = array<i64: 2, 10>}]} {
    %c0 = arith.constant 0 : index
    %c0_0 = arith.constant 0 : index
    %0 = vector.load %arg1[%c0, %c0_0] : memref<2x320xbf16, #tpu.memory_space<vmem>>, vector<2x320xbf16>
    %c0_1 = arith.constant 0 : index
    %c0_2 = arith.constant 0 : index
    %1 = vector.load %arg2[%c0_1, %c0_2] : memref<320x64xbf16, #tpu.memory_space<vmem>>, vector<320x64xbf16>
    %cst = arith.constant dense<0.000000e+00> : vector<2x64xf32>
    %2 = tpu.matmul %0, %1, %cst {dimension_numbers = #tpu.dot_dimension_numbers<[1], [0], [0], [1], [0, 0, 1, 1], [], []>} : vector<2x320xbf16>, vector<320x64xbf16>, vector<2x64xf32> -> vector<2x64xf32>
    %c0_3 = arith.constant 0 : index
    %c0_4 = arith.constant 0 : index
    %3 = vector.load %arg3[%c0_3, %c0_4] : memref<1x64xf32, #tpu.memory_space<vmem>>, vector<1x64xf32>
    %4 = vector.broadcast %3 : vector<1x64xf32> to vector<2x64xf32>
    %5 = arith.addf %2, %4 : vector<2x64xf32>
    %cst_5 = arith.constant 0.000000e+00 : f32
    %6 = vector.broadcast %cst_5 : f32 to vector<2x64xf32>
    %7 = arith.maximumf %5, %6 : vector<2x64xf32>
    %8 = arith.truncf %7 : vector<2x64xf32> to vector<2x64xbf16>
    %c0_6 = arith.constant 0 : index
    %c0_7 = arith.constant 0 : index
    %9 = vector.load %arg4[%c0_6, %c0_7] : memref<64x10xbf16, #tpu.memory_space<vmem>>, vector<64x10xbf16>
    %cst_8 = arith.constant dense<0.000000e+00> : vector<2x10xf32>
    %10 = tpu.matmul %8, %9, %cst_8 {dimension_numbers = #tpu.dot_dimension_numbers<[1], [0], [0], [1], [0, 0, 1, 1], [], []>} : vector<2x64xbf16>, vector<64x10xbf16>, vector<2x10xf32> -> vector<2x10xf32>
    %c0_9 = arith.constant 0 : index
    %c0_10 = arith.constant 0 : index
    %11 = vector.load %arg5[%c0_9, %c0_10] : memref<1x10xf32, #tpu.memory_space<vmem>>, vector<1x10xf32>
    %12 = vector.broadcast %11 : vector<1x10xf32> to vector<2x10xf32>
    %13 = arith.addf %10, %12 : vector<2x10xf32>
    %cst_11 = arith.constant dense<0xFF800000> : vector<2xf32>
    %14 = vector.multi_reduction <maximumf>, %13, %cst_11 [1] : vector<2x10xf32> to vector<2xf32>
    %15 = vector.shape_cast %14 : vector<2xf32> to vector<2x1xf32>
    %16 = vector.broadcast %15 : vector<2x1xf32> to vector<2x10xf32>
    %17 = arith.subf %13, %16 : vector<2x10xf32>
    %18 = math.exp %17 : vector<2x10xf32>
    %cst_12 = arith.constant dense<0.000000e+00> : vector<2xf32>
    %19 = vector.multi_reduction <add>, %18, %cst_12 [1] : vector<2x10xf32> to vector<2xf32>
    %20 = vector.shape_cast %19 : vector<2xf32> to vector<2x1xf32>
    %21 = math.log %20 : vector<2x1xf32>
    %22 = vector.broadcast %21 : vector<2x1xf32> to vector<2x10xf32>
    %23 = arith.subf %17, %22 : vector<2x10xf32>
    %c0_13 = arith.constant 0 : index
    %c0_14 = arith.constant 0 : index
    %24 = vector.load %arg6[%c0_13, %c0_14] : memref<2x10xf32, #tpu.memory_space<vmem>>, vector<2x10xf32>
    tpu.vector_store %arg6[%c0_13, %c0_14], %23 {strides = array<i32>} : memref<2x10xf32, #tpu.memory_space<vmem>>, vector<2x10xf32>,
    return
  }
  func.func @transform_0(%arg0: i32) -> (i32, i32) {
    %c0_i32 = arith.constant 0 : i32
    %c0_i32_0 = arith.constant 0 : i32
    return %arg0, %c0_i32 : i32, i32
  }
  func.func @transform_1(%arg0: i32) -> (i32, i32) {
    %c0_i32 = arith.constant 0 : i32
    %c0_i32_0 = arith.constant 0 : i32
    %c0_i32_1 = arith.constant 0 : i32
    return %c0_i32, %c0_i32_0 : i32, i32
  }
  func.func @transform_2(%arg0: i32) -> (i32, i32) {
    %c0_i32 = arith.constant 0 : i32
    %c0_i32_0 = arith.constant 0 : i32
    %c0_i32_1 = arith.constant 0 : i32
    return %c0_i32, %c0_i32_0 : i32, i32
  }
  func.func @transform_3(%arg0: i32) -> (i32, i32) {
    %c0_i32 = arith.constant 0 : i32
    %c0_i32_0 = arith.constant 0 : i32
    %c0_i32_1 = arith.constant 0 : i32
    return %c0_i32, %c0_i32_0 : i32, i32
  }
  func.func @transform_4(%arg0: i32) -> (i32, i32) {
    %c0_i32 = arith.constant 0 : i32
    %c0_i32_0 = arith.constant 0 : i32
    %c0_i32_1 = arith.constant 0 : i32
    return %c0_i32, %c0_i32_0 : i32, i32
  }
  func.func @transform_5(%arg0: i32) -> (i32, i32) {
    %c0_i32 = arith.constant 0 : i32
    %c0_i32_0 = arith.constant 0 : i32
    return %arg0, %c0_i32 : i32, i32
  }
}

</mosaic_0001>

<llo_original>
// kernel: npu_mnist_forward.3
$region0: #{npu_mnist_forward.3}
  #allocation0 [shape = 'u32[]', space=smem, size = 0x4, offset = 0x4, fixed_abs, tag = 'smem constant byte address 0x4 - core index']
  #allocation1 [shape = 'u32[72,128]{1,0:T(1,128)}', space=vmem, size = 0x9000, scoped, tag = 'internal scratch']
  %s0 = inlined_call_operand.vmem [shape: bf16[4,288,32], index: 0, kind: input, shape index: {}]
  %s1 = inlined_call_operand.vmem [shape: bf16[32,10], index: 1, kind: input, shape index: {}]
  %s2 = inlined_call_operand.vmem [shape: f32[1,10], index: 2, kind: input, shape index: {}]
  %s3 = inlined_call_operand.vmem [shape: bf16[288,10], index: 3, kind: output, shape index: {}]
  %s4 = sld [smem:[#allocation0]]
  $region86: #{npu_mnist_forward.3} parent=0
    _
  %s6 = ssub.s32 1, %s4
  %s7 = scalar_select 0, %s6, %s4
  $region1: #{npu_mnist_forward.3} parent=0
    #allocation2 [shape = 'u8[294912]{0}', space=vmem, size = 0x48000, scoped, tag = 'input window, operand 0']
    loop: start=0, step=1, limit=4
    $region2: #{npu_mnist_forward.3} parent=1 // loop_pre_header
      _
    $region3: #{npu_mnist_forward.3} parent=1 // loop_header
      %s9 = sphi 0, %s13
      %p10 = scmp.ge.s32.totalorder %s9, 4
      %s19 = sphi 0, %s21
      %s22 = sphi 0, %s19
      %s23 = sphi 0, %s22
      %s39 = sphi 0, %s23
      %s43 = sphi 0, %s43
      %s45 = sphi 0, %s43
      %s46 = sphi 0, %s45
      %s60 = sphi 0, %s46
      %s64 = sphi 0, %s64
      %s66 = sphi 0, %s64
      %s67 = sphi 0, %s66
      %s81 = sphi 0, %s67
      %s87 = sphi 0, %s89
      %s90 = sphi 0, %s87
      %s91 = sphi 0, %s90
      %s107 = sphi 0, %s91
    $region4: #{npu_mnist_forward.3} parent=1 // loop_header_branch
      %12 = sbr.rel (%p10) target = $region8
    $region5: #{npu_mnist_forward.3} parent=1 // loop_body
      %s14 = ssub.s32 %s9, 1
      %s15 = ssub.s32 %s9, 2
      %s16 = sadd.s32 %s9, 1
      %s17 = ssub.s32 %s9, %s16
      %p18 = scmp.eq.s32.totalorder %s17, 0
      %s20 = sadd.s32 %s19, 1
      %s21 = scalar_select %p18, %s19, %s20
      %p24 = pneg %p18
      %p25 = scmp.eq.s32.totalorder %s9, 1
      %p26 = por %p24, %p25
      %p27 = scmp.ne.s32.totalorder %s19, %s22
      %p28 = scmp.eq.s32.totalorder %s9, 0
      %p29 = por %p27, %p28
      %p30 = scmp.ne.s32.totalorder %s19, %s22
      %p31 = scmp.eq.s32.totalorder %s14, 1
      %p32 = por %p30, %p31
      %p33 = scmp.ne.s32.totalorder %s22, %s23
      %p34 = scmp.eq.s32.totalorder %s14, 0
      %p35 = por %p33, %p34
      %p36 = scmp.ne.s32.totalorder %s22, %s23
      %p37 = scmp.eq.s32.totalorder %s15, 1
      %p38 = por %p36, %p37
      %p40 = scmp.ne.s32.totalorder %s23, %s39
      %p41 = scmp.eq.s32.totalorder %s15, 0
      %p42 = por %p40, %p41
      %s44 = sadd.s32 %s43, 1
      %p47 = scmp.eq.s32.totalorder %s9, 1
      %p48 = scmp.ne.s32.totalorder %s43, %s45
      %p49 = scmp.eq.s32.totalorder %s9, 0
      %p50 = por %p48, %p49
      %p51 = scmp.ne.s32.totalorder %s43, %s45
      %p52 = scmp.eq.s32.totalorder %s14, 1
      %p53 = por %p51, %p52
      %p54 = scmp.ne.s32.totalorder %s45, %s46
      %p55 = scmp.eq.s32.totalorder %s14, 0
      %p56 = por %p54, %p55
      %p57 = scmp.ne.s32.totalorder %s45, %s46
      %p58 = scmp.eq.s32.totalorder %s15, 1
      %p59 = por %p57, %p58
      %p61 = scmp.ne.s32.totalorder %s46, %s60
      %p62 = scmp.eq.s32.totalorder %s15, 0
      %p63 = por %p61, %p62
      %s65 = sadd.s32 %s64, 1
      %p68 = scmp.eq.s32.totalorder %s9, 1
      %p69 = scmp.ne.s32.totalorder %s64, %s66
      %p70 = scmp.eq.s32.totalorder %s9, 0
      %p71 = por %p69, %p70
      %p72 = scmp.ne.s32.totalorder %s64, %s66
      %p73 = scmp.eq.s32.totalorder %s14, 1
      %p74 = por %p72, %p73
      %p75 = scmp.ne.s32.totalorder %s66, %s67
      %p76 = scmp.eq.s32.totalorder %s14, 0
      %p77 = por %p75, %p76
      %p78 = scmp.ne.s32.totalorder %s66, %s67
      %p79 = scmp.eq.s32.totalorder %s15, 1
      %p80 = por %p78, %p79
      %p82 = scmp.ne.s32.totalorder %s67, %s81
      %p83 = scmp.eq.s32.totalorder %s15, 0
      %p84 = por %p82, %p83
      %s85 = ssub.s32 %s9, %s16
      %p86 = scmp.eq.s32.totalorder %s85, 0
      %s88 = sadd.s32 %s87, 1
      %s89 = scalar_select %p86, %s87, %s88
      %p92 = pneg %p86
      %p93 = scmp.eq.s32.totalorder %s9, 1
      %p94 = por %p92, %p93
      %p95 = scmp.ne.s32.totalorder %s87, %s90
      %p96 = scmp.eq.s32.totalorder %s9, 0
      %p97 = por %p95, %p96
      %p98 = scmp.ne.s32.totalorder %s87, %s90
      %p99 = scmp.eq.s32.totalorder %s14, 1
      %p100 = por %p98, %p99
      %p101 = scmp.ne.s32.totalorder %s90, %s91
      %p102 = scmp.eq.s32.totalorder %s14, 0
      %p103 = por %p101, %p102
      %p104 = scmp.ne.s32.totalorder %s90, %s91
      %p105 = scmp.eq.s32.totalorder %s15, 1
      %p106 = por %p104, %p105
      %p108 = scmp.ne.s32.totalorder %s91, %s107
      %p109 = scmp.eq.s32.totalorder %s15, 0
      %p110 = por %p108, %p109
      %p111 = scmp.le.s32.totalorder 1, %s9
      %p112 = scmp.lt.s32.totalorder %s9, 3
      %p113 = pnand %p111, %p112
      %p114 = pneg %p113
      // Predicated region
      $region9: #{npu_mnist_forward.3} parent=5 // pred_check
        _
      $region10: #{npu_mnist_forward.3} parent=5 // pred_check_branch
        %116 = sbr.rel (%p113) target = $region12
      $region11: #{npu_mnist_forward.3} parent=5 // pred_region
        %s117 = ssub.s32 %s9, 1
        // Predicated region
        $region13: #{npu_mnist_forward.3} parent=11 // pred_check
          %p118 = pneg %p56
        $region14: #{npu_mnist_forward.3} parent=11 // pred_check_branch
          %120 = sbr.rel (%p118) target = $region16
        $region15: #{npu_mnist_forward.3} parent=11 // pred_region
          _
        $region16: #{npu_mnist_forward.3} parent=11 // pred_fallthru
          _
        // Predicated region
        $region17: #{npu_mnist_forward.3} parent=11 // pred_check
          %p121 = pneg %p77
        $region18: #{npu_mnist_forward.3} parent=11 // pred_check_branch
          %123 = sbr.rel (%p121) target = $region20
        $region19: #{npu_mnist_forward.3} parent=11 // pred_region
          _
        $region20: #{npu_mnist_forward.3} parent=11 // pred_fallthru
          _
      $region12: #{npu_mnist_forward.3} parent=5 // pred_fallthru
        _
      %p124 = scmp.lt.s32.totalorder %s9, 2
      // Predicated region
      $region21: #{npu_mnist_forward.3} parent=5 // pred_check
        %p125 = pneg %p124
      $region22: #{npu_mnist_forward.3} parent=5 // pred_check_branch
        %127 = sbr.rel (%p125) target = $region24
      $region23: #{npu_mnist_forward.3} parent=5 // pred_region
        // Predicated region
        $region25: #{npu_mnist_forward.3} parent=23 // pred_check
          %p128 = pneg %p29
        $region26: #{npu_mnist_forward.3} parent=23 // pred_check_branch
          %130 = sbr.rel (%p128) target = $region28
        $region27: #{npu_mnist_forward.3} parent=23 // pred_region
          %s131 = sand.u32 %s19, 1
          %s132 = sand.u32 %s19, 1
          %s133 = smul.addr %s132, 288
          %s134 = scalar_lea.vmem [#allocation2], %s133
          %s135 = smul.u32 18, %s9
          %s136 = smul.addr %s135, 4
          %s137 = scalar_lea.vmem %s0, %s136
          // Predicated region
          $region29: #{npu_mnist_forward.3} parent=27 // pred_check
            _
          $region30: #{npu_mnist_forward.3} parent=27 // pred_check_branch
            %139 = sbr.rel (0) target = $region32
          $region31: #{npu_mnist_forward.3} parent=27 // pred_region
            // Predicated region
            $region33: #{npu_mnist_forward.3} parent=31 // pred_check
              _
            $region34: #{npu_mnist_forward.3} parent=31 // pred_check_branch
              %141 = sbr.rel target = $region36
            $region35: #{npu_mnist_forward.3} parent=31 // pred_region
              // Predicated region
              $region48: #{npu_mnist_forward.3} parent=35 // pred_check
                _
              $region49: #{npu_mnist_forward.3} parent=35 // pred_check_branch
                %299 = sbr.rel (0) target = $region51
              $region50: #{npu_mnist_forward.3} parent=35 // pred_region
                loop: start=0, step=1, limit=1
                $region52: #{npu_mnist_forward.3} parent=50 // loop_pre_header
                  _
                $region53: #{npu_mnist_forward.3} parent=50 // loop_header
                  %s301 = sphi 0, %s305
                  %p302 = scmp.ge.s32.totalorder %s301, 1
                  %s306 = sphi %s137, %s137
                  %s307 = sphi %s134, %s134
                $region54: #{npu_mnist_forward.3} parent=50 // loop_header_branch
                  %304 = sbr.rel (%p302) target = $region58
                $region55: #{npu_mnist_forward.3} parent=50 // loop_body
                  _
                $region56: #{npu_mnist_forward.3} parent=50 // loop_footer
                  %s305 = sadd.s32 1, %s301
                $region57: #{npu_mnist_forward.3} parent=50 // loop_footer_branch
                  %300 = sbr.rel target = $region53
                $region58: #{npu_mnist_forward.3} parent=50 // loop_exit
                  _
                %s309 = ssub.s32 16, 1
                loop: start=0, step=1, limit=1
                $region59: #{npu_mnist_forward.3} parent=50 // loop_pre_header
                  _
                $region60: #{npu_mnist_forward.3} parent=50 // loop_header
                  %s311 = sphi 0, %s315
                  %p312 = scmp.ge.s32.totalorder %s311, 1
                  %s316 = sphi %s137, %s137
                  %s317 = sphi %s134, %s134
                $region61: #{npu_mnist_forward.3} parent=50 // loop_header_branch
                  %314 = sbr.rel (%p312) target = $region65
                $region62: #{npu_mnist_forward.3} parent=50 // loop_body
                  %v318 = vld [vmem:[%s316] sm:%s309]
                  %319 = vst [vmem:[%s317] sm:%s309] %v318
                  %v320 = vld [vmem:[%s316 + $0x4] sm:%s309]
                  %321 = vst [vmem:[%s317 + $0x4] sm:%s309] %v320
                  %v322 = vld [vmem:[%s316 + $0x8] sm:%s309]
                  %323 = vst [vmem:[%s317 + $0x8] sm:%s309] %v322
                  %v324 = vld [vmem:[%s316 + $0xc] sm:%s309]
                  %325 = vst [vmem:[%s317 + $0xc] sm:%s309] %v324
                  %v326 = vld [vmem:[%s316 + $0x10] sm:%s309]
                  %327 = vst [vmem:[%s317 + $0x10] sm:%s309] %v326
                  %v328 = vld [vmem:[%s316 + $0x14] sm:%s309]
                  %329 = vst [vmem:[%s317 + $0x14] sm:%s309] %v328
                  %v330 = vld [vmem:[%s316 + $0x18] sm:%s309]
                  %331 = vst [vmem:[%s317 + $0x18] sm:%s309] %v330
                  %v332 = vld [vmem:[%s316 + $0x1c] sm:%s309]
                  %333 = vst [vmem:[%s317 + $0x1c] sm:%s309] %v332
                  %v334 = vld [vmem:[%s316 + $0x20] sm:%s309]
                  %335 = vst [vmem:[%s317 + $0x20] sm:%s309] %v334
                  %v336 = vld [vmem:[%s316 + $0x24] sm:%s309]
                  %337 = vst [vmem:[%s317 + $0x24] sm:%s309] %v336
                  %v338 = vld [vmem:[%s316 + $0x28] sm:%s309]
                  %339 = vst [vmem:[%s317 + $0x28] sm:%s309] %v338
                  %v340 = vld [vmem:[%s316 + $0x2c] sm:%s309]
                  %341 = vst [vmem:[%s317 + $0x2c] sm:%s309] %v340
                  %v342 = vld [vmem:[%s316 + $0x30] sm:%s309]
                  %343 = vst [vmem:[%s317 + $0x30] sm:%s309] %v342
                  %v344 = vld [vmem:[%s316 + $0x34] sm:%s309]
                  %345 = vst [vmem:[%s317 + $0x34] sm:%s309] %v344
                  %v346 = vld [vmem:[%s316 + $0x38] sm:%s309]
                  %347 = vst [vmem:[%s317 + $0x38] sm:%s309] %v346
                  %v348 = vld [vmem:[%s316 + $0x3c] sm:%s309]
                  %349 = vst [vmem:[%s317 + $0x3c] sm:%s309] %v348
                  %v350 = vld [vmem:[%s316 + $0x40] sm:%s309]
                  %351 = vst [vmem:[%s317 + $0x40] sm:%s309] %v350
                  %v352 = vld [vmem:[%s316 + $0x44] sm:%s309]
                  %353 = vst [vmem:[%s317 + $0x44] sm:%s309] %v352
                  %v354 = vld [vmem:[%s316 + $0x90] sm:%s309]
                  %355 = vst [vmem:[%s317 + $0x48] sm:%s309] %v354
                  %v356 = vld [vmem:[%s316 + $0x94] sm:%s309]
                  %357 = vst [vmem:[%s317 + $0x4c] sm:%s309] %v356
                  %v358 = vld [vmem:[%s316 + $0x98] sm:%s309]
                  %359 = vst [vmem:[%s317 + $0x50] sm:%s309] %v358
                  %v360 = vld [vmem:[%s316 + $0x9c] sm:%s309]
                  %361 = vst [vmem:[%s317 + $0x54] sm:%s309] %v360
                  %v362 = vld [vmem:[%s316 + $0xa0] sm:%s309]
                  %363 = vst [vmem:[%s317 + $0x58] sm:%s309] %v362
                  %v364 = vld [vmem:[%s316 + $0xa4] sm:%s309]
                  %365 = vst [vmem:[%s317 + $0x5c] sm:%s309] %v364
                  %v366 = vld [vmem:[%s316 + $0xa8] sm:%s309]
                  %367 = vst [vmem:[%s317 + $0x60] sm:%s309] %v366
                  %v368 = vld [vmem:[%s316 + $0xac] sm:%s309]
                  %369 = vst [vmem:[%s317 + $0x64] sm:%s309] %v368
                  %v370 = vld [vmem:[%s316 + $0xb0] sm:%s309]
                  %371 = vst [vmem:[%s317 + $0x68] sm:%s309] %v370
                  %v372 = vld [vmem:[%s316 + $0xb4] sm:%s309]
                  %373 = vst [vmem:[%s317 + $0x6c] sm:%s309] %v372
                  %v374 = vld [vmem:[%s316 + $0xb8] sm:%s309]
                  %375 = vst [vmem:[%s317 + $0x70] sm:%s309] %v374
                  %v376 = vld [vmem:[%s316 + $0xbc] sm:%s309]
                  %377 = vst [vmem:[%s317 + $0x74] sm:%s309] %v376
                  %v378 = vld [vmem:[%s316 + $0xc0] sm:%s309]
                  %379 = vst [vmem:[%s317 + $0x78] sm:%s309] %v378
                  %v380 = vld [vmem:[%s316 + $0xc4] sm:%s309]
                  %381 = vst [vmem:[%s317 + $0x7c] sm:%s309] %v380
                  %v382 = vld [vmem:[%s316 + $0xc8] sm:%s309]
                  %383 = vst [vmem:[%s317 + $0x80] sm:%s309] %v382
                  %v384 = vld [vmem:[%s316 + $0xcc] sm:%s309]
                  %385 = vst [vmem:[%s317 + $0x84] sm:%s309] %v384
                  %v386 = vld [vmem:[%s316 + $0xd0] sm:%s309]
                  %387 = vst [vmem:[%s317 + $0x88] sm:%s309] %v386
                  %v388 = vld [vmem:[%s316 + $0xd4] sm:%s309]
                  %389 = vst [vmem:[%s317 + $0x8c] sm:%s309] %v388
                  %v390 = vld [vmem:[%s316 + $0x120] sm:%s309]
                  %391 = vst [vmem:[%s317 + $0x90] sm:%s309] %v390
                  %v392 = vld [vmem:[%s316 + $0x124] sm:%s309]
                  %393 = vst [vmem:[%s317 + $0x94] sm:%s309] %v392
                  %v394 = vld [vmem:[%s316 + $0x128] sm:%s309]
                  %395 = vst [vmem:[%s317 + $0x98] sm:%s309] %v394
                  %v396 = vld [vmem:[%s316 + $0x12c] sm:%s309]
                  %397 = vst [vmem:[%s317 + $0x9c] sm:%s309] %v396
                  %v398 = vld [vmem:[%s316 + $0x130] sm:%s309]
                  %399 = vst [vmem:[%s317 + $0xa0] sm:%s309] %v398
                  %v400 = vld [vmem:[%s316 + $0x134] sm:%s309]
                  %401 = vst [vmem:[%s317 + $0xa4] sm:%s309] %v400
                  %v402 = vld [vmem:[%s316 + $0x138] sm:%s309]
                  %403 = vst [vmem:[%s317 + $0xa8] sm:%s309] %v402
                  %v404 = vld [vmem:[%s316 + $0x13c] sm:%s309]
                  %405 = vst [vmem:[%s317 + $0xac] sm:%s309] %v404
                  %v406 = vld [vmem:[%s316 + $0x140] sm:%s309]
                  %407 = vst [vmem:[%s317 + $0xb0] sm:%s309] %v406
                  %v408 = vld [vmem:[%s316 + $0x144] sm:%s309]
                  %409 = vst [vmem:[%s317 + $0xb4] sm:%s309] %v408
                  %v410 = vld [vmem:[%s316 + $0x148] sm:%s309]
                  %411 = vst [vmem:[%s317 + $0xb8] sm:%s309] %v410
                  %v412 = vld [vmem:[%s316 + $0x14c] sm:%s309]
                  %413 = vst [vmem:[%s317 + $0xbc] sm:%s309] %v412
                  %v414 = vld [vmem:[%s316 + $0x150] sm:%s309]
                  %415 = vst [vmem:[%s317 + $0xc0] sm:%s309] %v414
                  %v416 = vld [vmem:[%s316 + $0x154] sm:%s309]
                  %417 = vst [vmem:[%s317 + $0xc4] sm:%s309] %v416
                  %v418 = vld [vmem:[%s316 + $0x158] sm:%s309]
                  %419 = vst [vmem:[%s317 + $0xc8] sm:%s309] %v418
                  %v420 = vld [vmem:[%s316 + $0x15c] sm:%s309]
                  %421 = vst [vmem:[%s317 + $0xcc] sm:%s309] %v420
                  %v422 = vld [vmem:[%s316 + $0x160] sm:%s309]
                  %423 = vst [vmem:[%s317 + $0xd0] sm:%s309] %v422
                  %v424 = vld [vmem:[%s316 + $0x164] sm:%s309]
                  %425 = vst [vmem:[%s317 + $0xd4] sm:%s309] %v424
                  %v426 = vld [vmem:[%s316 + $0x1b0] sm:%s309]
                  %427 = vst [vmem:[%s317 + $0xd8] sm:%s309] %v426
                  %v428 = vld [vmem:[%s316 + $0x1b4] sm:%s309]
                  %429 = vst [vmem:[%s317 + $0xdc] sm:%s309] %v428
                  %v430 = vld [vmem:[%s316 + $0x1b8] sm:%s309]
                  %431 = vst [vmem:[%s317 + $0xe0] sm:%s309] %v430
                  %v432 = vld [vmem:[%s316 + $0x1bc] sm:%s309]
                  %433 = vst [vmem:[%s317 + $0xe4] sm:%s309] %v432
                  %v434 = vld [vmem:[%s316 + $0x1c0] sm:%s309]
                  %435 = vst [vmem:[%s317 + $0xe8] sm:%s309] %v434
                  %v436 = vld [vmem:[%s316 + $0x1c4] sm:%s309]
                  %437 = vst [vmem:[%s317 + $0xec] sm:%s309] %v436
                  %v438 = vld [vmem:[%s316 + $0x1c8] sm:%s309]
                  %439 = vst [vmem:[%s317 + $0xf0] sm:%s309] %v438
                  %v440 = vld [vmem:[%s316 + $0x1cc] sm:%s309]
                  %441 = vst [vmem:[%s317 + $0xf4] sm:%s309] %v440
                  %v442 = vld [vmem:[%s316 + $0x1d0] sm:%s309]
                  %443 = vst [vmem:[%s317 + $0xf8] sm:%s309] %v442
                  %v444 = vld [vmem:[%s316 + $0x1d4] sm:%s309]
                  %445 = vst [vmem:[%s317 + $0xfc] sm:%s309] %v444
                  %v446 = vld [vmem:[%s316 + $0x1d8] sm:%s309]
                  %447 = vst [vmem:[%s317 + $0x100] sm:%s309] %v446
                  %v448 = vld [vmem:[%s316 + $0x1dc] sm:%s309]
                  %449 = vst [vmem:[%s317 + $0x104] sm:%s309] %v448
                  %v450 = vld [vmem:[%s316 + $0x1e0] sm:%s309]
                  %451 = vst [vmem:[%s317 + $0x108] sm:%s309] %v450
                  %v452 = vld [vmem:[%s316 + $0x1e4] sm:%s309]
                  %453 = vst [vmem:[%s317 + $0x10c] sm:%s309] %v452
                  %v454 = vld [vmem:[%s316 + $0x1e8] sm:%s309]
                  %455 = vst [vmem:[%s317 + $0x110] sm:%s309] %v454
                  %v456 = vld [vmem:[%s316 + $0x1ec] sm:%s309]
                  %457 = vst [vmem:[%s317 + $0x114] sm:%s309] %v456
                  %v458 = vld [vmem:[%s316 + $0x1f0] sm:%s309]
                  %459 = vst [vmem:[%s317 + $0x118] sm:%s309] %v458
                  %v460 = vld [vmem:[%s316 + $0x1f4] sm:%s309]
                  %461 = vst [vmem:[%s317 + $0x11c] sm:%s309] %v460
                $region63: #{npu_mnist_forward.3} parent=50 // loop_footer
                  %s315 = sadd.s32 1, %s311
                $region64: #{npu_mnist_forward.3} parent=50 // loop_footer_branch
                  %310 = sbr.rel target = $region60
                $region65: #{npu_mnist_forward.3} parent=50 // loop_exit
                  _
              $region51: #{npu_mnist_forward.3} parent=35 // pred_fallthru
                _
            $region36: #{npu_mnist_forward.3} parent=31 // pred_fallthru
              _
            // Predicated region
            $region37: #{npu_mnist_forward.3} parent=31 // pred_check
              _
            $region38: #{npu_mnist_forward.3} parent=31 // pred_check_branch
              %143 = sbr.rel (0) target = $region40
            $region39: #{npu_mnist_forward.3} parent=31 // pred_region
              %s145 = ssub.s32 16, 1
              loop: start=0, step=1, limit=1
              $region41: #{npu_mnist_forward.3} parent=39 // loop_pre_header
                _
              $region42: #{npu_mnist_forward.3} parent=39 // loop_header
                %s147 = sphi 0, %s151
                %p148 = scmp.ge.s32.totalorder %s147, 1
                %s152 = sphi %s137, %s137
                %s153 = sphi %s134, %s134
              $region43: #{npu_mnist_forward.3} parent=39 // loop_header_branch
                %150 = sbr.rel (%p148) target = $region47
              $region44: #{npu_mnist_forward.3} parent=39 // loop_body
                %v154 = vld [vmem:[%s152] sm:%s145]
                %155 = vst [vmem:[%s153] sm:%s145] %v154
                %v156 = vld [vmem:[%s152 + $0x4] sm:%s145]
                %157 = vst [vmem:[%s153 + $0x4] sm:%s145] %v156
                %v158 = vld [vmem:[%s152 + $0x8] sm:%s145]
                %159 = vst [vmem:[%s153 + $0x8] sm:%s145] %v158
                %v160 = vld [vmem:[%s152 + $0xc] sm:%s145]
                %161 = vst [vmem:[%s153 + $0xc] sm:%s145] %v160
                %v162 = vld [vmem:[%s152 + $0x10] sm:%s145]
                %163 = vst [vmem:[%s153 + $0x10] sm:%s145] %v162
                %v164 = vld [vmem:[%s152 + $0x14] sm:%s145]
                %165 = vst [vmem:[%s153 + $0x14] sm:%s145] %v164
                %v166 = vld [vmem:[%s152 + $0x18] sm:%s145]
                %167 = vst [vmem:[%s153 + $0x18] sm:%s145] %v166
                %v168 = vld [vmem:[%s152 + $0x1c] sm:%s145]
                %169 = vst [vmem:[%s153 + $0x1c] sm:%s145] %v168
                %v170 = vld [vmem:[%s152 + $0x20] sm:%s145]
                %171 = vst [vmem:[%s153 + $0x20] sm:%s145] %v170
                %v172 = vld [vmem:[%s152 + $0x24] sm:%s145]
                %173 = vst [vmem:[%s153 + $0x24] sm:%s145] %v172
                %v174 = vld [vmem:[%s152 + $0x28] sm:%s145]
                %175 = vst [vmem:[%s153 + $0x28] sm:%s145] %v174
                %v176 = vld [vmem:[%s152 + $0x2c] sm:%s145]
                %177 = vst [vmem:[%s153 + $0x2c] sm:%s145] %v176
                %v178 = vld [vmem:[%s152 + $0x30] sm:%s145]
                %179 = vst [vmem:[%s153 + $0x30] sm:%s145] %v178
                %v180 = vld [vmem:[%s152 + $0x34] sm:%s145]
                %181 = vst [vmem:[%s153 + $0x34] sm:%s145] %v180
                %v182 = vld [vmem:[%s152 + $0x38] sm:%s145]
                %183 = vst [vmem:[%s153 + $0x38] sm:%s145] %v182
                %v184 = vld [vmem:[%s152 + $0x3c] sm:%s145]
                %185 = vst [vmem:[%s153 + $0x3c] sm:%s145] %v184
                %v186 = vld [vmem:[%s152 + $0x40] sm:%s145]
                %187 = vst [vmem:[%s153 + $0x40] sm:%s145] %v186
                %v188 = vld [vmem:[%s152 + $0x44] sm:%s145]
                %189 = vst [vmem:[%s153 + $0x44] sm:%s145] %v188
                %v190 = vld [vmem:[%s152 + $0x90] sm:%s145]
                %191 = vst [vmem:[%s153 + $0x48] sm:%s145] %v190
                %v192 = vld [vmem:[%s152 + $0x94] sm:%s145]
                %193 = vst [vmem:[%s153 + $0x4c] sm:%s145] %v192
                %v194 = vld [vmem:[%s152 + $0x98] sm:%s145]
                %195 = vst [vmem:[%s153 + $0x50] sm:%s145] %v194
                %v196 = vld [vmem:[%s152 + $0x9c] sm:%s145]
                %197 = vst [vmem:[%s153 + $0x54] sm:%s145] %v196
                %v198 = vld [vmem:[%s152 + $0xa0] sm:%s145]
                %199 = vst [vmem:[%s153 + $0x58] sm:%s145] %v198
                %v200 = vld [vmem:[%s152 + $0xa4] sm:%s145]
                %201 = vst [vmem:[%s153 + $0x5c] sm:%s145] %v200
                %v202 = vld [vmem:[%s152 + $0xa8] sm:%s145]
                %203 = vst [vmem:[%s153 + $0x60] sm:%s145] %v202
                %v204 = vld [vmem:[%s152 + $0xac] sm:%s145]
                %205 = vst [vmem:[%s153 + $0x64] sm:%s145] %v204
                %v206 = vld [vmem:[%s152 + $0xb0] sm:%s145]
                %207 = vst [vmem:[%s153 + $0x68] sm:%s145] %v206
                %v208 = vld [vmem:[%s152 + $0xb4] sm:%s145]
                %209 = vst [vmem:[%s153 + $0x6c] sm:%s145] %v208
                %v210 = vld [vmem:[%s152 + $0xb8] sm:%s145]
                %211 = vst [vmem:[%s153 + $0x70] sm:%s145] %v210
                %v212 = vld [vmem:[%s152 + $0xbc] sm:%s145]
                %213 = vst [vmem:[%s153 + $0x74] sm:%s145] %v212
                %v214 = vld [vmem:[%s152 + $0xc0] sm:%s145]
                %215 = vst [vmem:[%s153 + $0x78] sm:%s145] %v214
                %v216 = vld [vmem:[%s152 + $0xc4] sm:%s145]
                %217 = vst [vmem:[%s153 + $0x7c] sm:%s145] %v216
                %v218 = vld [vmem:[%s152 + $0xc8] sm:%s145]
                %219 = vst [vmem:[%s153 + $0x80] sm:%s145] %v218
                %v220 = vld [vmem:[%s152 + $0xcc] sm:%s145]
                %221 = vst [vmem:[%s153 + $0x84] sm:%s145] %v220
                %v222 = vld [vmem:[%s152 + $0xd0] sm:%s145]
                %223 = vst [vmem:[%s153 + $0x88] sm:%s145] %v222
                %v224 = vld [vmem:[%s152 + $0xd4] sm:%s145]
                %225 = vst [vmem:[%s153 + $0x8c] sm:%s145] %v224
                %v226 = vld [vmem:[%s152 + $0x120] sm:%s145]
                %227 = vst [vmem:[%s153 + $0x90] sm:%s145] %v226
                %v228 = vld [vmem:[%s152 + $0x124] sm:%s145]
                %229 = vst [vmem:[%s153 + $0x94] sm:%s145] %v228
                %v230 = vld [vmem:[%s152 + $0x128] sm:%s145]
                %231 = vst [vmem:[%s153 + $0x98] sm:%s145] %v230
                %v232 = vld [vmem:[%s152 + $0x12c] sm:%s145]
                %233 = vst [vmem:[%s153 + $0x9c] sm:%s145] %v232
                %v234 = vld [vmem:[%s152 + $0x130] sm:%s145]
                %235 = vst [vmem:[%s153 + $0xa0] sm:%s145] %v234
                %v236 = vld [vmem:[%s152 + $0x134] sm:%s145]
                %237 = vst [vmem:[%s153 + $0xa4] sm:%s145] %v236
                %v238 = vld [vmem:[%s152 + $0x138] sm:%s145]
                %239 = vst [vmem:[%s153 + $0xa8] sm:%s145] %v238
                %v240 = vld [vmem:[%s152 + $0x13c] sm:%s145]
                %241 = vst [vmem:[%s153 + $0xac] sm:%s145] %v240
                %v242 = vld [vmem:[%s152 + $0x140] sm:%s145]
                %243 = vst [vmem:[%s153 + $0xb0] sm:%s145] %v242
                %v244 = vld [vmem:[%s152 + $0x144] sm:%s145]
                %245 = vst [vmem:[%s153 + $0xb4] sm:%s145] %v244
                %v246 = vld [vmem:[%s152 + $0x148] sm:%s145]
                %247 = vst [vmem:[%s153 + $0xb8] sm:%s145] %v246
                %v248 = vld [vmem:[%s152 + $0x14c] sm:%s145]
                %249 = vst [vmem:[%s153 + $0xbc] sm:%s145] %v248
                %v250 = vld [vmem:[%s152 + $0x150] sm:%s145]
                %251 = vst [vmem:[%s153 + $0xc0] sm:%s145] %v250
                %v252 = vld [vmem:[%s152 + $0x154] sm:%s145]
                %253 = vst [vmem:[%s153 + $0xc4] sm:%s145] %v252
                %v254 = vld [vmem:[%s152 + $0x158] sm:%s145]
                %255 = vst [vmem:[%s153 + $0xc8] sm:%s145] %v254
                %v256 = vld [vmem:[%s152 + $0x15c] sm:%s145]
                %257 = vst [vmem:[%s153 + $0xcc] sm:%s145] %v256
                %v258 = vld [vmem:[%s152 + $0x160] sm:%s145]
                %259 = vst [vmem:[%s153 + $0xd0] sm:%s145] %v258
                %v260 = vld [vmem:[%s152 + $0x164] sm:%s145]
                %261 = vst [vmem:[%s153 + $0xd4] sm:%s145] %v260
                %v262 = vld [vmem:[%s152 + $0x1b0] sm:%s145]
                %263 = vst [vmem:[%s153 + $0xd8] sm:%s145] %v262
                %v264 = vld [vmem:[%s152 + $0x1b4] sm:%s145]
                %265 = vst [vmem:[%s153 + $0xdc] sm:%s145] %v264
                %v266 = vld [vmem:[%s152 + $0x1b8] sm:%s145]
                %267 = vst [vmem:[%s153 + $0xe0] sm:%s145] %v266
                %v268 = vld [vmem:[%s152 + $0x1bc] sm:%s145]
                %269 = vst [vmem:[%s153 + $0xe4] sm:%s145] %v268
                %v270 = vld [vmem:[%s152 + $0x1c0] sm:%s145]
                %271 = vst [vmem:[%s153 + $0xe8] sm:%s145] %v270
                %v272 = vld [vmem:[%s152 + $0x1c4] sm:%s145]
                %273 = vst [vmem:[%s153 + $0xec] sm:%s145] %v272
                %v274 = vld [vmem:[%s152 + $0x1c8] sm:%s145]
                %275 = vst [vmem:[%s153 + $0xf0] sm:%s145] %v274
                %v276 = vld [vmem:[%s152 + $0x1cc] sm:%s145]
                %277 = vst [vmem:[%s153 + $0xf4] sm:%s145] %v276
                %v278 = vld [vmem:[%s152 + $0x1d0] sm:%s145]
                %279 = vst [vmem:[%s153 + $0xf8] sm:%s145] %v278
                %v280 = vld [vmem:[%s152 + $0x1d4] sm:%s145]
                %281 = vst [vmem:[%s153 + $0xfc] sm:%s145] %v280
                %v282 = vld [vmem:[%s152 + $0x1d8] sm:%s145]
                %283 = vst [vmem:[%s153 + $0x100] sm:%s145] %v282
                %v284 = vld [vmem:[%s152 + $0x1dc] sm:%s145]
                %285 = vst [vmem:[%s153 + $0x104] sm:%s145] %v284
                %v286 = vld [vmem:[%s152 + $0x1e0] sm:%s145]
                %287 = vst [vmem:[%s153 + $0x108] sm:%s145] %v286
                %v288 = vld [vmem:[%s152 + $0x1e4] sm:%s145]
                %289 = vst [vmem:[%s153 + $0x10c] sm:%s145] %v288
                %v290 = vld [vmem:[%s152 + $0x1e8] sm:%s145]
                %291 = vst [vmem:[%s153 + $0x110] sm:%s145] %v290
                %v292 = vld [vmem:[%s152 + $0x1ec] sm:%s145]
                %293 = vst [vmem:[%s153 + $0x114] sm:%s145] %v292
                %v294 = vld [vmem:[%s152 + $0x1f0] sm:%s145]
                %295 = vst [vmem:[%s153 + $0x118] sm:%s145] %v294
                %v296 = vld [vmem:[%s152 + $0x1f4] sm:%s145]
                %297 = vst [vmem:[%s153 + $0x11c] sm:%s145] %v296
              $region45: #{npu_mnist_forward.3} parent=39 // loop_footer
                %s151 = sadd.s32 1, %s147
              $region46: #{npu_mnist_forward.3} parent=39 // loop_footer_branch
                %146 = sbr.rel target = $region42
              $region47: #{npu_mnist_forward.3} parent=39 // loop_exit
                _
            $region40: #{npu_mnist_forward.3} parent=31 // pred_fallthru
              _
          $region32: #{npu_mnist_forward.3} parent=27 // pred_fallthru
            _
          %462 = vnop
        $region28: #{npu_mnist_forward.3} parent=23 // pred_fallthru
          _
      $region24: #{npu_mnist_forward.3} parent=5 // pred_fallthru
        _
      %p463 = scmp.le.s32.totalorder 1, %s9
      %p464 = scmp.lt.s32.totalorder %s9, 3
      %p465 = pnand %p463, %p464
      %p466 = pneg %p465
      // Predicated region
      $region66: #{npu_mnist_forward.3} parent=5 // pred_check
        _
      $region67: #{npu_mnist_forward.3} parent=5 // pred_check_branch
        %468 = sbr.rel (%p465) target = $region69
      $region68: #{npu_mnist_forward.3} parent=5 // pred_region
        %s469 = ssub.s32 %s9, 1
        %s470 = sand.u32 %s22, 1
        %s471 = sand.u32 %s22, 1
        %s472 = smul.addr %s471, 288
        %s473 = scalar_lea.vmem [#allocation2], %s472
        // Predicated region
        $region70: #{npu_mnist_forward.3} parent=68 // pred_check
          %p474 = pneg %p35
        $region71: #{npu_mnist_forward.3} parent=68 // pred_check_branch
          %476 = sbr.rel (%p474) target = $region73
        $region72: #{npu_mnist_forward.3} parent=68 // pred_region
          _
        $region73: #{npu_mnist_forward.3} parent=68 // pred_fallthru
          _
        %s477 = sand.u32 %s22, 1
        %s478 = sand.u32 %s22, 1
        %s479 = smul.addr %s478, 288
        %s480 = scalar_lea.vmem [#allocation2], %s479
        %p481 = pneg %p35
        %p482 = pneg %p32
        %p483 = pneg %p56
        %p484 = pneg %p53
        %p485 = pneg %p77
        %p486 = pneg %p74
        %p487 = pneg %p103
        %p488 = pneg %p100
        %s489 = smul.u32 18, %s14
        %p490 = scmp.lt.s32.totalorder %s489, 35
        %s491 = scalar_select %p490, %s489, 35
        %s492 = smul.addr %s491, 4
        %s493 = scalar_lea.vmem %s3, %s492
        %s494 = smul.u32 18, %s14
        %s495 = smul.u32 18, %s14
        %p496 = scmp.lt.s32.totalorder %s495, 35
        %s497 = scalar_select %p496, %s495, 35
        %s498 = smul.addr %s497, 4
        %s499 = scalar_lea.vmem %s3, %s498
        %s500 = smul.u32 18, %s14
        %v502 = vld [vmem:[%s473] sm:$0xf]
        %v503 = vld [vmem:[%s473 + $0x4] sm:$0xf]
        %v504 = vld [vmem:[%s473 + $0x8] sm:$0xf]
        %v505 = vld [vmem:[%s473 + $0xc] sm:$0xf]
        %v506 = vld [vmem:[%s473 + $0x10] sm:$0xf]
        %v507 = vld [vmem:[%s473 + $0x14] sm:$0xf]
        %v508 = vld [vmem:[%s473 + $0x18] sm:$0xf]
        %v509 = vld [vmem:[%s473 + $0x1c] sm:$0xf]
        %v510 = vld [vmem:[%s473 + $0x20] sm:$0xf]
        %v511 = vld [vmem:[%s473 + $0x24] sm:$0xf]
        %v512 = vld [vmem:[%s473 + $0x28] sm:$0xf]
        %v513 = vld [vmem:[%s473 + $0x2c] sm:$0xf]
        %v514 = vld [vmem:[%s473 + $0x30] sm:$0xf]
        %v515 = vld [vmem:[%s473 + $0x34] sm:$0xf]
        %v516 = vld [vmem:[%s473 + $0x38] sm:$0xf]
        %v517 = vld [vmem:[%s473 + $0x3c] sm:$0xf]
        %v518 = vld [vmem:[%s473 + $0x40] sm:$0xf]
        %v519 = vld [vmem:[%s473 + $0x44] sm:$0xf]
        %v520 = vld [vmem:[%s473 + $0x48] sm:$0xf]
        %v521 = vld [vmem:[%s473 + $0x4c] sm:$0xf]
        %v522 = vld [vmem:[%s473 + $0x50] sm:$0xf]
        %v523 = vld [vmem:[%s473 + $0x54] sm:$0xf]
        %v524 = vld [vmem:[%s473 + $0x58] sm:$0xf]
        %v525 = vld [vmem:[%s473 + $0x5c] sm:$0xf]
        %v526 = vld [vmem:[%s473 + $0x60] sm:$0xf]
        %v527 = vld [vmem:[%s473 + $0x64] sm:$0xf]
        %v528 = vld [vmem:[%s473 + $0x68] sm:$0xf]
        %v529 = vld [vmem:[%s473 + $0x6c] sm:$0xf]
        %v530 = vld [vmem:[%s473 + $0x70] sm:$0xf]
        %v531 = vld [vmem:[%s473 + $0x74] sm:$0xf]
        %v532 = vld [vmem:[%s473 + $0x78] sm:$0xf]
        %v533 = vld [vmem:[%s473 + $0x7c] sm:$0xf]
        %v534 = vld [vmem:[%s473 + $0x80] sm:$0xf]
        %v535 = vld [vmem:[%s473 + $0x84] sm:$0xf]
        %v536 = vld [vmem:[%s473 + $0x88] sm:$0xf]
        %v537 = vld [vmem:[%s473 + $0x8c] sm:$0xf]
        %v538 = vld [vmem:[%s473 + $0x90] sm:$0xf]
        %v539 = vld [vmem:[%s473 + $0x94] sm:$0xf]
        %v540 = vld [vmem:[%s473 + $0x98] sm:$0xf]
        %v541 = vld [vmem:[%s473 + $0x9c] sm:$0xf]
        %v542 = vld [vmem:[%s473 + $0xa0] sm:$0xf]
        %v543 = vld [vmem:[%s473 + $0xa4] sm:$0xf]
        %v544 = vld [vmem:[%s473 + $0xa8] sm:$0xf]
        %v545 = vld [vmem:[%s473 + $0xac] sm:$0xf]
        %v546 = vld [vmem:[%s473 + $0xb0] sm:$0xf]
        %v547 = vld [vmem:[%s473 + $0xb4] sm:$0xf]
        %v548 = vld [vmem:[%s473 + $0xb8] sm:$0xf]
        %v549 = vld [vmem:[%s473 + $0xbc] sm:$0xf]
        %v550 = vld [vmem:[%s473 + $0xc0] sm:$0xf]
        %v551 = vld [vmem:[%s473 + $0xc4] sm:$0xf]
        %v552 = vld [vmem:[%s473 + $0xc8] sm:$0xf]
        %v553 = vld [vmem:[%s473 + $0xcc] sm:$0xf]
        %v554 = vld [vmem:[%s473 + $0xd0] sm:$0xf]
        %v555 = vld [vmem:[%s473 + $0xd4] sm:$0xf]
        %v556 = vld [vmem:[%s473 + $0xd8] sm:$0xf]
        %v557 = vld [vmem:[%s473 + $0xdc] sm:$0xf]
        %v558 = vld [vmem:[%s473 + $0xe0] sm:$0xf]
        %v559 = vld [vmem:[%s473 + $0xe4] sm:$0xf]
        %v560 = vld [vmem:[%s473 + $0xe8] sm:$0xf]
        %v561 = vld [vmem:[%s473 + $0xec] sm:$0xf]
        %v562 = vld [vmem:[%s473 + $0xf0] sm:$0xf]
        %v563 = vld [vmem:[%s473 + $0xf4] sm:$0xf]
        %v564 = vld [vmem:[%s473 + $0xf8] sm:$0xf]
        %v565 = vld [vmem:[%s473 + $0xfc] sm:$0xf]
        %v566 = vld [vmem:[%s473 + $0x100] sm:$0xf]
        %v567 = vld [vmem:[%s473 + $0x104] sm:$0xf]
        %v568 = vld [vmem:[%s473 + $0x108] sm:$0xf]
        %v569 = vld [vmem:[%s473 + $0x10c] sm:$0xf]
        %v570 = vld [vmem:[%s473 + $0x110] sm:$0xf]
        %v571 = vld [vmem:[%s473 + $0x114] sm:$0xf]
        %v572 = vld [vmem:[%s473 + $0x118] sm:$0xf]
        %v573 = vld [vmem:[%s473 + $0x11c] sm:$0xf]
        %v574 = vld [vmem:[%s1] sm:$0xf]
        %v575 = vld [vmem:[%s1 + $0x4] sm:$0xf]
        %v576 = vld [vmem:[%s1 + $0x8] sm:$0xf]
        %v577 = vld [vmem:[%s1 + $0xc] sm:$0xf]
        %v650 = vunpack.c.l.b16 %v502
        %v651 = vunpack.c.l.b16 %v503
        %v652 = vunpack.c.l.b16 %v504
        %v653 = vunpack.c.l.b16 %v505
        %v654 = vunpack.c.l.b16 %v506
        %v655 = vunpack.c.l.b16 %v507
        %v656 = vunpack.c.l.b16 %v508
        %v657 = vunpack.c.l.b16 %v509
        %v658 = vunpack.c.l.b16 %v510
        %v659 = vunpack.c.l.b16 %v511
        %v660 = vunpack.c.l.b16 %v512
        %v661 = vunpack.c.l.b16 %v513
        %v662 = vunpack.c.l.b16 %v514
        %v663 = vunpack.c.l.b16 %v515
        %v664 = vunpack.c.l.b16 %v516
        %v665 = vunpack.c.l.b16 %v517
        %v666 = vunpack.c.l.b16 %v518
        %v667 = vunpack.c.l.b16 %v519
        %v668 = vunpack.c.l.b16 %v520
        %v669 = vunpack.c.l.b16 %v521
        %v670 = vunpack.c.l.b16 %v522
        %v671 = vunpack.c.l.b16 %v523
        %v672 = vunpack.c.l.b16 %v524
        %v673 = vunpack.c.l.b16 %v525
        %v674 = vunpack.c.l.b16 %v526
        %v675 = vunpack.c.l.b16 %v527
        %v676 = vunpack.c.l.b16 %v528
        %v677 = vunpack.c.l.b16 %v529
        %v678 = vunpack.c.l.b16 %v530
        %v679 = vunpack.c.l.b16 %v531
        %v680 = vunpack.c.l.b16 %v532
        %v681 = vunpack.c.l.b16 %v533
        %v682 = vunpack.c.l.b16 %v534
        %v683 = vunpack.c.l.b16 %v535
        %v684 = vunpack.c.l.b16 %v536
        %v685 = vunpack.c.l.b16 %v537
        %v686 = vunpack.c.l.b16 %v538
        %v687 = vunpack.c.l.b16 %v539
        %v688 = vunpack.c.l.b16 %v540
        %v689 = vunpack.c.l.b16 %v541
        %v690 = vunpack.c.l.b16 %v542
        %v691 = vunpack.c.l.b16 %v543
        %v692 = vunpack.c.l.b16 %v544
        %v693 = vunpack.c.l.b16 %v545
        %v694 = vunpack.c.l.b16 %v546
        %v695 = vunpack.c.l.b16 %v547
        %v696 = vunpack.c.l.b16 %v548
        %v697 = vunpack.c.l.b16 %v549
        %v698 = vunpack.c.l.b16 %v550
        %v699 = vunpack.c.l.b16 %v551
        %v700 = vunpack.c.l.b16 %v552
        %v701 = vunpack.c.l.b16 %v553
        %v702 = vunpack.c.l.b16 %v554
        %v703 = vunpack.c.l.b16 %v555
        %v704 = vunpack.c.l.b16 %v556
        %v705 = vunpack.c.l.b16 %v557
        %v706 = vunpack.c.l.b16 %v558
        %v707 = vunpack.c.l.b16 %v559
        %v708 = vunpack.c.l.b16 %v560
        %v709 = vunpack.c.l.b16 %v561
        %v710 = vunpack.c.l.b16 %v562
        %v711 = vunpack.c.l.b16 %v563
        %v712 = vunpack.c.l.b16 %v564
        %v713 = vunpack.c.l.b16 %v565
        %v714 = vunpack.c.l.b16 %v566
        %v715 = vunpack.c.l.b16 %v567
        %v716 = vunpack.c.l.b16 %v568
        %v717 = vunpack.c.l.b16 %v569
        %v718 = vunpack.c.l.b16 %v570
        %v719 = vunpack.c.l.b16 %v571
        %v720 = vunpack.c.l.b16 %v572
        %v721 = vunpack.c.l.b16 %v573
        %v722 = vpack.c.b16 %v651, %v650
        %v723 = vpack.c.b16 %v653, %v652
        %v724 = vpack.c.b16 %v655, %v654
        %v725 = vpack.c.b16 %v657, %v656
        %v726 = vpack.c.b16 %v659, %v658
        %v727 = vpack.c.b16 %v661, %v660
        %v728 = vpack.c.b16 %v663, %v662
        %v729 = vpack.c.b16 %v665, %v664
        %v730 = vpack.c.b16 %v667, %v666
        %v731 = vpack.c.b16 %v669, %v668
        %v732 = vpack.c.b16 %v671, %v670
        %v733 = vpack.c.b16 %v673, %v672
        %v734 = vpack.c.b16 %v675, %v674
        %v735 = vpack.c.b16 %v677, %v676
        %v736 = vpack.c.b16 %v679, %v678
        %v737 = vpack.c.b16 %v681, %v680
        %v738 = vpack.c.b16 %v683, %v682
        %v739 = vpack.c.b16 %v685, %v684
        %v740 = vpack.c.b16 %v687, %v686
        %v741 = vpack.c.b16 %v689, %v688
        %v742 = vpack.c.b16 %v691, %v690
        %v743 = vpack.c.b16 %v693, %v692
        %v744 = vpack.c.b16 %v695, %v694
        %v745 = vpack.c.b16 %v697, %v696
        %v746 = vpack.c.b16 %v699, %v698
        %v747 = vpack.c.b16 %v701, %v700
        %v748 = vpack.c.b16 %v703, %v702
        %v749 = vpack.c.b16 %v705, %v704
        %v750 = vpack.c.b16 %v707, %v706
        %v751 = vpack.c.b16 %v709, %v708
        %v752 = vpack.c.b16 %v711, %v710
        %v753 = vpack.c.b16 %v713, %v712
        %v754 = vpack.c.b16 %v715, %v714
        %v755 = vpack.c.b16 %v717, %v716
        %v756 = vpack.c.b16 %v719, %v718
        %v757 = vpack.c.b16 %v721, %v720
        %v762 = vunpack.c.l.b16 %v574
        %v763 = vunpack.c.l.b16 %v575
        %v764 = vunpack.c.l.b16 %v576
        %v765 = vunpack.c.l.b16 %v577
        %v766 = vpack.c.b16 %v763, %v762
        %v767 = vpack.c.b16 %v765, %v764
        %vm770 = vcmask 261120
        %v772 = vsel %vm770, %v722, 0
        %v775 = vsel %vm770, %v723, 0
        %v778 = vsel %vm770, %v724, 0
        %v781 = vsel %vm770, %v725, 0
        %v784 = vsel %vm770, %v726, 0
        %v787 = vsel %vm770, %v727, 0
        %v790 = vsel %vm770, %v728, 0
        %v793 = vsel %vm770, %v729, 0
        %v796 = vsel %vm770, %v730, 0
        %v799 = vsel %vm770, %v731, 0
        %v802 = vsel %vm770, %v732, 0
        %v805 = vsel %vm770, %v733, 0
        %v808 = vsel %vm770, %v734, 0
        %v811 = vsel %vm770, %v735, 0
        %v814 = vsel %vm770, %v736, 0
        %v817 = vsel %vm770, %v737, 0
        %v820 = vsel %vm770, %v738, 0
        %v823 = vsel %vm770, %v739, 0
        %v826 = vsel %vm770, %v740, 0
        %v829 = vsel %vm770, %v741, 0
        %v832 = vsel %vm770, %v742, 0
        %v835 = vsel %vm770, %v743, 0
        %v838 = vsel %vm770, %v744, 0
        %v841 = vsel %vm770, %v745, 0
        %v844 = vsel %vm770, %v746, 0
        %v847 = vsel %vm770, %v747, 0
        %v850 = vsel %vm770, %v748, 0
        %v853 = vsel %vm770, %v749, 0
        %v856 = vsel %vm770, %v750, 0
        %v859 = vsel %vm770, %v751, 0
        %v862 = vsel %vm770, %v752, 0
        %v865 = vsel %vm770, %v753, 0
        %v868 = vsel %vm770, %v754, 0
        %v871 = vsel %vm770, %v755, 0
        %v874 = vsel %vm770, %v756, 0
        %v877 = vsel %vm770, %v757, 0
        %879 = vmatpush.bf16.msra.mxu0 0
        %880 = vmatpush.bf16.msra.mxu0 0
        %881 = vmatpush.bf16.msra.mxu0 0
        %882 = vmatpush.bf16.msra.mxu0 0
        %883 = vmatpush.bf16.msra.mxu0 0
        %884 = vmatpush.bf16.msra.mxu0 0
        %885 = vmatpush.bf16.msra.mxu0 %v767
        %886 = vmatpush.bf16.msra.mxu0 %v766
        %887 = vmatmul.bf16.gmra.mxu0 %v772
        %v888 = vpop.f32.mrf.mxu0
        %v889 = vadd.f32 0.0, %v888
        %v890 = vpop.f32.mrf.mxu0
        %v891 = vadd.f32 0.0, %v890
        %892 = vmatmul.bf16.gmra.mxu0 %v775
        %v893 = vpop.f32.mrf.mxu0
        %v894 = vadd.f32 0.0, %v893
        %v895 = vpop.f32.mrf.mxu0
        %v896 = vadd.f32 0.0, %v895
        %897 = vmatmul.bf16.gmra.mxu0 %v778
        %v898 = vpop.f32.mrf.mxu0
        %v899 = vadd.f32 0.0, %v898
        %v900 = vpop.f32.mrf.mxu0
        %v901 = vadd.f32 0.0, %v900
        %902 = vmatmul.bf16.gmra.mxu0 %v781
        %v903 = vpop.f32.mrf.mxu0
        %v904 = vadd.f32 0.0, %v903
        %v905 = vpop.f32.mrf.mxu0
        %v906 = vadd.f32 0.0, %v905
        %907 = vmatmul.bf16.gmra.mxu0 %v784
        %v908 = vpop.f32.mrf.mxu0
        %v909 = vadd.f32 0.0, %v908
        %v910 = vpop.f32.mrf.mxu0
        %v911 = vadd.f32 0.0, %v910
        %912 = vmatmul.bf16.gmra.mxu0 %v787
        %v913 = vpop.f32.mrf.mxu0
        %v914 = vadd.f32 0.0, %v913
        %v915 = vpop.f32.mrf.mxu0
        %v916 = vadd.f32 0.0, %v915
        %917 = vmatmul.bf16.gmra.mxu0 %v790
        %v918 = vpop.f32.mrf.mxu0
        %v919 = vadd.f32 0.0, %v918
        %v920 = vpop.f32.mrf.mxu0
        %v921 = vadd.f32 0.0, %v920
        %922 = vmatmul.bf16.gmra.mxu0 %v793
        %v923 = vpop.f32.mrf.mxu0
        %v924 = vadd.f32 0.0, %v923
        %v925 = vpop.f32.mrf.mxu0
        %v926 = vadd.f32 0.0, %v925
        %927 = vmatmul.bf16.gmra.mxu0 %v796
        %v928 = vpop.f32.mrf.mxu0
        %v929 = vadd.f32 0.0, %v928
        %v930 = vpop.f32.mrf.mxu0
        %v931 = vadd.f32 0.0, %v930
        %932 = vmatmul.bf16.gmra.mxu0 %v799
        %v933 = vpop.f32.mrf.mxu0
        %v934 = vadd.f32 0.0, %v933
        %v935 = vpop.f32.mrf.mxu0
        %v936 = vadd.f32 0.0, %v935
        %937 = vmatmul.bf16.gmra.mxu0 %v802
        %v938 = vpop.f32.mrf.mxu0
        %v939 = vadd.f32 0.0, %v938
        %v940 = vpop.f32.mrf.mxu0
        %v941 = vadd.f32 0.0, %v940
        %942 = vmatmul.bf16.gmra.mxu0 %v805
        %v943 = vpop.f32.mrf.mxu0
        %v944 = vadd.f32 0.0, %v943
        %v945 = vpop.f32.mrf.mxu0
        %v946 = vadd.f32 0.0, %v945
        %947 = vmatmul.bf16.gmra.mxu0 %v808
        %v948 = vpop.f32.mrf.mxu0
        %v949 = vadd.f32 0.0, %v948
        %v950 = vpop.f32.mrf.mxu0
        %v951 = vadd.f32 0.0, %v950
        %952 = vmatmul.bf16.gmra.mxu0 %v811
        %v953 = vpop.f32.mrf.mxu0
        %v954 = vadd.f32 0.0, %v953
        %v955 = vpop.f32.mrf.mxu0
        %v956 = vadd.f32 0.0, %v955
        %957 = vmatmul.bf16.gmra.mxu0 %v814
        %v958 = vpop.f32.mrf.mxu0
        %v959 = vadd.f32 0.0, %v958
        %v960 = vpop.f32.mrf.mxu0
        %v961 = vadd.f32 0.0, %v960
        %962 = vmatmul.bf16.gmra.mxu0 %v817
        %v963 = vpop.f32.mrf.mxu0
        %v964 = vadd.f32 0.0, %v963
        %v965 = vpop.f32.mrf.mxu0
        %v966 = vadd.f32 0.0, %v965
        %967 = vmatmul.bf16.gmra.mxu0 %v820
        %v968 = vpop.f32.mrf.mxu0
        %v969 = vadd.f32 0.0, %v968
        %v970 = vpop.f32.mrf.mxu0
        %v971 = vadd.f32 0.0, %v970
        %972 = vmatmul.bf16.gmra.mxu0 %v823
        %v973 = vpop.f32.mrf.mxu0
        %v974 = vadd.f32 0.0, %v973
        %v975 = vpop.f32.mrf.mxu0
        %v976 = vadd.f32 0.0, %v975
        %977 = vmatmul.bf16.gmra.mxu0 %v826
        %v978 = vpop.f32.mrf.mxu0
        %v979 = vadd.f32 0.0, %v978
        %v980 = vpop.f32.mrf.mxu0
        %v981 = vadd.f32 0.0, %v980
        %982 = vmatmul.bf16.gmra.mxu0 %v829
        %v983 = vpop.f32.mrf.mxu0
        %v984 = vadd.f32 0.0, %v983
        %v985 = vpop.f32.mrf.mxu0
        %v986 = vadd.f32 0.0, %v985
        %987 = vmatmul.bf16.gmra.mxu0 %v832
        %v988 = vpop.f32.mrf.mxu0
        %v989 = vadd.f32 0.0, %v988
        %v990 = vpop.f32.mrf.mxu0
        %v991 = vadd.f32 0.0, %v990
        %992 = vmatmul.bf16.gmra.mxu0 %v835
        %v993 = vpop.f32.mrf.mxu0
        %v994 = vadd.f32 0.0, %v993
        %v995 = vpop.f32.mrf.mxu0
        %v996 = vadd.f32 0.0, %v995
        %997 = vmatmul.bf16.gmra.mxu0 %v838
        %v998 = vpop.f32.mrf.mxu0
        %v999 = vadd.f32 0.0, %v998
        %v1000 = vpop.f32.mrf.mxu0
        %v1001 = vadd.f32 0.0, %v1000
        %1002 = vmatmul.bf16.gmra.mxu0 %v841
        %v1003 = vpop.f32.mrf.mxu0
        %v1004 = vadd.f32 0.0, %v1003
        %v1005 = vpop.f32.mrf.mxu0
        %v1006 = vadd.f32 0.0, %v1005
        %1007 = vmatmul.bf16.gmra.mxu0 %v844
        %v1008 = vpop.f32.mrf.mxu0
        %v1009 = vadd.f32 0.0, %v1008
        %v1010 = vpop.f32.mrf.mxu0
        %v1011 = vadd.f32 0.0, %v1010
        %1012 = vmatmul.bf16.gmra.mxu0 %v847
        %v1013 = vpop.f32.mrf.mxu0
        %v1014 = vadd.f32 0.0, %v1013
        %v1015 = vpop.f32.mrf.mxu0
        %v1016 = vadd.f32 0.0, %v1015
        %1017 = vmatmul.bf16.gmra.mxu0 %v850
        %v1018 = vpop.f32.mrf.mxu0
        %v1019 = vadd.f32 0.0, %v1018
        %v1020 = vpop.f32.mrf.mxu0
        %v1021 = vadd.f32 0.0, %v1020
        %1022 = vmatmul.bf16.gmra.mxu0 %v853
        %v1023 = vpop.f32.mrf.mxu0
        %v1024 = vadd.f32 0.0, %v1023
        %v1025 = vpop.f32.mrf.mxu0
        %v1026 = vadd.f32 0.0, %v1025
        %1027 = vmatmul.bf16.gmra.mxu0 %v856
        %v1028 = vpop.f32.mrf.mxu0
        %v1029 = vadd.f32 0.0, %v1028
        %v1030 = vpop.f32.mrf.mxu0
        %v1031 = vadd.f32 0.0, %v1030
        %1032 = vmatmul.bf16.gmra.mxu0 %v859
        %v1033 = vpop.f32.mrf.mxu0
        %v1034 = vadd.f32 0.0, %v1033
        %v1035 = vpop.f32.mrf.mxu0
        %v1036 = vadd.f32 0.0, %v1035
        %1037 = vmatmul.bf16.gmra.mxu0 %v862
        %v1038 = vpop.f32.mrf.mxu0
        %v1039 = vadd.f32 0.0, %v1038
        %v1040 = vpop.f32.mrf.mxu0
        %v1041 = vadd.f32 0.0, %v1040
        %1042 = vmatmul.bf16.gmra.mxu0 %v865
        %v1043 = vpop.f32.mrf.mxu0
        %v1044 = vadd.f32 0.0, %v1043
        %v1045 = vpop.f32.mrf.mxu0
        %v1046 = vadd.f32 0.0, %v1045
        %1047 = vmatmul.bf16.gmra.mxu0 %v868
        %v1048 = vpop.f32.mrf.mxu0
        %v1049 = vadd.f32 0.0, %v1048
        %v1050 = vpop.f32.mrf.mxu0
        %v1051 = vadd.f32 0.0, %v1050
        %1052 = vmatmul.bf16.gmra.mxu0 %v871
        %v1053 = vpop.f32.mrf.mxu0
        %v1054 = vadd.f32 0.0, %v1053
        %v1055 = vpop.f32.mrf.mxu0
        %v1056 = vadd.f32 0.0, %v1055
        %1057 = vmatmul.bf16.gmra.mxu0 %v874
        %v1058 = vpop.f32.mrf.mxu0
        %v1059 = vadd.f32 0.0, %v1058
        %v1060 = vpop.f32.mrf.mxu0
        %v1061 = vadd.f32 0.0, %v1060
        %1062 = vmatmul.bf16.gmra.mxu0 %v877
        %v1063 = vpop.f32.mrf.mxu0
        %v1064 = vadd.f32 0.0, %v1063
        %v1065 = vpop.f32.mrf.mxu0
        %v1066 = vadd.f32 0.0, %v1065
        %1067 = vdwg.mxu0
        %vm1068 = vcmask 80896
        %v1069 = vsel %vm1068, %v889, -inf
        %v1070 = vsel %vm1068, %v934, -inf
        %v1071 = vmax.f32 %v1069, %v1070
        %v1072 = vsel %vm1068, %v979, -inf
        %v1073 = vmax.f32 %v1071, %v1072
        %v1074 = vsel %vm1068, %v1024, -inf
        %v1075 = vmax.f32 %v1073, %v1074
        %v1076 = vsel %vm1068, %v891, -inf
        %v1077 = vsel %vm1068, %v936, -inf
        %v1078 = vmax.f32 %v1076, %v1077
        %v1079 = vsel %vm1068, %v981, -inf
        %v1080 = vmax.f32 %v1078, %v1079
        %v1081 = vsel %vm1068, %v1026, -inf
        %v1082 = vmax.f32 %v1080, %v1081
        %v1083 = vsel %vm1068, %v894, -inf
        %v1084 = vsel %vm1068, %v939, -inf
        %v1085 = vmax.f32 %v1083, %v1084
        %v1086 = vsel %vm1068, %v984, -inf
        %v1087 = vmax.f32 %v1085, %v1086
        %v1088 = vsel %vm1068, %v1029, -inf
        %v1089 = vmax.f32 %v1087, %v1088
        %v1090 = vsel %vm1068, %v896, -inf
        %v1091 = vsel %vm1068, %v941, -inf
        %v1092 = vmax.f32 %v1090, %v1091
        %v1093 = vsel %vm1068, %v986, -inf
        %v1094 = vmax.f32 %v1092, %v1093
        %v1095 = vsel %vm1068, %v1031, -inf
        %v1096 = vmax.f32 %v1094, %v1095
        %v1097 = vsel %vm1068, %v899, -inf
        %v1098 = vsel %vm1068, %v944, -inf
        %v1099 = vmax.f32 %v1097, %v1098
        %v1100 = vsel %vm1068, %v989, -inf
        %v1101 = vmax.f32 %v1099, %v1100
        %v1102 = vsel %vm1068, %v1034, -inf
        %v1103 = vmax.f32 %v1101, %v1102
        %v1104 = vsel %vm1068, %v901, -inf
        %v1105 = vsel %vm1068, %v946, -inf
        %v1106 = vmax.f32 %v1104, %v1105
        %v1107 = vsel %vm1068, %v991, -inf
        %v1108 = vmax.f32 %v1106, %v1107
        %v1109 = vsel %vm1068, %v1036, -inf
        %v1110 = vmax.f32 %v1108, %v1109
        %v1111 = vsel %vm1068, %v904, -inf
        %v1112 = vsel %vm1068, %v949, -inf
        %v1113 = vmax.f32 %v1111, %v1112
        %v1114 = vsel %vm1068, %v994, -inf
        %v1115 = vmax.f32 %v1113, %v1114
        %v1116 = vsel %vm1068, %v1039, -inf
        %v1117 = vmax.f32 %v1115, %v1116
        %v1118 = vsel %vm1068, %v906, -inf
        %v1119 = vsel %vm1068, %v951, -inf
        %v1120 = vmax.f32 %v1118, %v1119
        %v1121 = vsel %vm1068, %v996, -inf
        %v1122 = vmax.f32 %v1120, %v1121
        %v1123 = vsel %vm1068, %v1041, -inf
        %v1124 = vmax.f32 %v1122, %v1123
        %v1125 = vsel %vm1068, %v909, -inf
        %v1126 = vsel %vm1068, %v954, -inf
        %v1127 = vmax.f32 %v1125, %v1126
        %v1128 = vsel %vm1068, %v999, -inf
        %v1129 = vmax.f32 %v1127, %v1128
        %v1130 = vsel %vm1068, %v1044, -inf
        %v1131 = vmax.f32 %v1129, %v1130
        %v1132 = vsel %vm1068, %v911, -inf
        %v1133 = vsel %vm1068, %v956, -inf
        %v1134 = vmax.f32 %v1132, %v1133
        %v1135 = vsel %vm1068, %v1001, -inf
        %v1136 = vmax.f32 %v1134, %v1135
        %v1137 = vsel %vm1068, %v1046, -inf
        %v1138 = vmax.f32 %v1136, %v1137
        %v1139 = vsel %vm1068, %v914, -inf
        %v1140 = vsel %vm1068, %v959, -inf
        %v1141 = vmax.f32 %v1139, %v1140
        %v1142 = vsel %vm1068, %v1004, -inf
        %v1143 = vmax.f32 %v1141, %v1142
        %v1144 = vsel %vm1068, %v1049, -inf
        %v1145 = vmax.f32 %v1143, %v1144
        %v1146 = vsel %vm1068, %v916, -inf
        %v1147 = vsel %vm1068, %v961, -inf
        %v1148 = vmax.f32 %v1146, %v1147
        %v1149 = vsel %vm1068, %v1006, -inf
        %v1150 = vmax.f32 %v1148, %v1149
        %v1151 = vsel %vm1068, %v1051, -inf
        %v1152 = vmax.f32 %v1150, %v1151
        %v1153 = vsel %vm1068, %v919, -inf
        %v1154 = vsel %vm1068, %v964, -inf
        %v1155 = vmax.f32 %v1153, %v1154
        %v1156 = vsel %vm1068, %v1009, -inf
        %v1157 = vmax.f32 %v1155, %v1156
        %v1158 = vsel %vm1068, %v1054, -inf
        %v1159 = vmax.f32 %v1157, %v1158
        %v1160 = vsel %vm1068, %v921, -inf
        %v1161 = vsel %vm1068, %v966, -inf
        %v1162 = vmax.f32 %v1160, %v1161
        %v1163 = vsel %vm1068, %v1011, -inf
        %v1164 = vmax.f32 %v1162, %v1163
        %v1165 = vsel %vm1068, %v1056, -inf
        %v1166 = vmax.f32 %v1164, %v1165
        %v1167 = vsel %vm1068, %v924, -inf
        %v1168 = vsel %vm1068, %v969, -inf
        %v1169 = vmax.f32 %v1167, %v1168
        %v1170 = vsel %vm1068, %v1014, -inf
        %v1171 = vmax.f32 %v1169, %v1170
        %v1172 = vsel %vm1068, %v1059, -inf
        %v1173 = vmax.f32 %v1171, %v1172
        %v1174 = vsel %vm1068, %v926, -inf
        %v1175 = vsel %vm1068, %v971, -inf
        %v1176 = vmax.f32 %v1174, %v1175
        %v1177 = vsel %vm1068, %v1016, -inf
        %v1178 = vmax.f32 %v1176, %v1177
        %v1179 = vsel %vm1068, %v1061, -inf
        %v1180 = vmax.f32 %v1178, %v1179
        %v1181 = vsel %vm1068, %v929, -inf
        %v1182 = vsel %vm1068, %v974, -inf
        %v1183 = vmax.f32 %v1181, %v1182
        %v1184 = vsel %vm1068, %v1019, -inf
        %v1185 = vmax.f32 %v1183, %v1184
        %v1186 = vsel %vm1068, %v1064, -inf
        %v1187 = vmax.f32 %v1185, %v1186
        %v1188 = vsel %vm1068, %v931, -inf
        %v1189 = vsel %vm1068, %v976, -inf
        %v1190 = vmax.f32 %v1188, %v1189
        %v1191 = vsel %vm1068, %v1021, -inf
        %v1192 = vmax.f32 %v1190, %v1191
        %v1193 = vsel %vm1068, %v1066, -inf
        %v1194 = vmax.f32 %v1192, %v1193
        %v1195 = vld [vmem:[%s2] sm:$0x1]
        %v1197 = vperm.slane %v1195, 0
        %v1199 = vadd.f32 %v1075, %v1197
        %v1200 = vadd.f32 %v1082, %v1197
        %v1201 = vadd.f32 %v1089, %v1197
        %v1202 = vadd.f32 %v1096, %v1197
        %v1203 = vadd.f32 %v1103, %v1197
        %v1204 = vadd.f32 %v1110, %v1197
        %v1205 = vadd.f32 %v1117, %v1197
        %v1206 = vadd.f32 %v1124, %v1197
        %v1207 = vadd.f32 %v1131, %v1197
        %v1208 = vadd.f32 %v1138, %v1197
        %v1209 = vadd.f32 %v1145, %v1197
        %v1210 = vadd.f32 %v1152, %v1197
        %v1211 = vadd.f32 %v1159, %v1197
        %v1212 = vadd.f32 %v1166, %v1197
        %v1213 = vadd.f32 %v1173, %v1197
        %v1214 = vadd.f32 %v1180, %v1197
        %v1215 = vadd.f32 %v1187, %v1197
        %v1216 = vadd.f32 %v1194, %v1197
        %v1217 = vmax.f32 %v1199, 0.0
        %v1218 = vmax.f32 %v1200, 0.0
        %v1219 = vmax.f32 %v1201, 0.0
        %v1220 = vmax.f32 %v1202, 0.0
        %v1221 = vmax.f32 %v1203, 0.0
        %v1222 = vmax.f32 %v1204, 0.0
        %v1223 = vmax.f32 %v1205, 0.0
        %v1224 = vmax.f32 %v1206, 0.0
        %v1225 = vmax.f32 %v1207, 0.0
        %v1226 = vmax.f32 %v1208, 0.0
        %v1227 = vmax.f32 %v1209, 0.0
        %v1228 = vmax.f32 %v1210, 0.0
        %v1229 = vmax.f32 %v1211, 0.0
        %v1230 = vmax.f32 %v1212, 0.0
        %v1231 = vmax.f32 %v1213, 0.0
        %v1232 = vmax.f32 %v1214, 0.0
        %v1233 = vmax.f32 %v1215, 0.0
        %v1234 = vmax.f32 %v1216, 0.0
        %v1235 = vpack.c.bf16 %v1217, %v1217
        %v1236 = vpack.c.bf16 %v1218, %v1218
        %v1237 = vpack.c.bf16 %v1219, %v1219
        %v1238 = vpack.c.bf16 %v1220, %v1220
        %v1239 = vpack.c.bf16 %v1221, %v1221
        %v1240 = vpack.c.bf16 %v1222, %v1222
        %v1241 = vpack.c.bf16 %v1223, %v1223
        %v1242 = vpack.c.bf16 %v1224, %v1224
        %v1243 = vpack.c.bf16 %v1225, %v1225
        %v1244 = vpack.c.bf16 %v1226, %v1226
        %v1245 = vpack.c.bf16 %v1227, %v1227
        %v1246 = vpack.c.bf16 %v1228, %v1228
        %v1247 = vpack.c.bf16 %v1229, %v1229
        %v1248 = vpack.c.bf16 %v1230, %v1230
        %v1249 = vpack.c.bf16 %v1231, %v1231
        %v1250 = vpack.c.bf16 %v1232, %v1232
        %v1251 = vpack.c.bf16 %v1233, %v1233
        %v1252 = vpack.c.bf16 %v1234, %v1234
        %vm1253 = vcmask 76800
        %1254 = vst.msk [vmem:[%s499] sm:$0xf] %vm1253, %v1235
        %1255 = vst.msk [vmem:[%s499 + $0x4] sm:$0xf] %vm1253, %v1236
        %1256 = vst.msk [vmem:[%s499 + $0x8] sm:$0xf] %vm1253, %v1237
        %1257 = vst.msk [vmem:[%s499 + $0xc] sm:$0xf] %vm1253, %v1238
        %1258 = vst.msk [vmem:[%s499 + $0x10] sm:$0xf] %vm1253, %v1239
        %1259 = vst.msk [vmem:[%s499 + $0x14] sm:$0xf] %vm1253, %v1240
        %1260 = vst.msk [vmem:[%s499 + $0x18] sm:$0xf] %vm1253, %v1241
        %1261 = vst.msk [vmem:[%s499 + $0x1c] sm:$0xf] %vm1253, %v1242
        %1262 = vst.msk [vmem:[%s499 + $0x20] sm:$0xf] %vm1253, %v1243
        %1263 = vst.msk [vmem:[%s499 + $0x24] sm:$0xf] %vm1253, %v1244
        %1264 = vst.msk [vmem:[%s499 + $0x28] sm:$0xf] %vm1253, %v1245
        %1265 = vst.msk [vmem:[%s499 + $0x2c] sm:$0xf] %vm1253, %v1246
        %1266 = vst.msk [vmem:[%s499 + $0x30] sm:$0xf] %vm1253, %v1247
        %1267 = vst.msk [vmem:[%s499 + $0x34] sm:$0xf] %vm1253, %v1248
        %1268 = vst.msk [vmem:[%s499 + $0x38] sm:$0xf] %vm1253, %v1249
        %1269 = vst.msk [vmem:[%s499 + $0x3c] sm:$0xf] %vm1253, %v1250
        %1270 = vst.msk [vmem:[%s499 + $0x40] sm:$0xf] %vm1253, %v1251
        %1271 = vst.msk [vmem:[%s499 + $0x44] sm:$0xf] %vm1253, %v1252
        %s1272 = smul.u32 18, %s14
        %p1273 = scmp.lt.s32.totalorder %s1272, 35
        %s1274 = scalar_select %p1273, %s1272, 35
        %s1275 = smul.addr %s1274, 4
        %s1276 = scalar_lea.vmem %s3, %s1275
        // Predicated region
        $region74: #{npu_mnist_forward.3} parent=68 // pred_check
          %p1277 = pneg %p100
        $region75: #{npu_mnist_forward.3} parent=68 // pred_check_branch
          %1279 = sbr.rel (%p1277) target = $region77
        $region76: #{npu_mnist_forward.3} parent=68 // pred_region
          %s1280 = smul.u32 18, %s14
        $region77: #{npu_mnist_forward.3} parent=68 // pred_fallthru
          _
      $region69: #{npu_mnist_forward.3} parent=5 // pred_fallthru
        _
      %p1281 = scmp.le.s32.totalorder 2, %s9
      // Predicated region
      $region78: #{npu_mnist_forward.3} parent=5 // pred_check
        %p1282 = pneg %p1281
      $region79: #{npu_mnist_forward.3} parent=5 // pred_check_branch
        %1284 = sbr.rel (%p1282) target = $region81
      $region80: #{npu_mnist_forward.3} parent=5 // pred_region
        %s1285 = ssub.s32 %s9, 2
        // Predicated region
        $region82: #{npu_mnist_forward.3} parent=80 // pred_check
          %p1286 = pneg %p106
        $region83: #{npu_mnist_forward.3} parent=80 // pred_check_branch
          %1288 = sbr.rel (%p1286) target = $region85
        $region84: #{npu_mnist_forward.3} parent=80 // pred_region
          %s1289 = smul.u32 18, %s15
          %p1290 = scmp.lt.s32.totalorder %s1289, 35
          %s1291 = scalar_select %p1290, %s1289, 35
          %s1292 = smul.addr %s1291, 4
          %s1293 = scalar_lea.vmem %s3, %s1292
        $region85: #{npu_mnist_forward.3} parent=80 // pred_fallthru
          _
      $region81: #{npu_mnist_forward.3} parent=5 // pred_fallthru
        _
    $region6: #{npu_mnist_forward.3} parent=1 // loop_footer
      %s13 = sadd.s32 1, %s9
    $region7: #{npu_mnist_forward.3} parent=1 // loop_footer_branch
      %8 = sbr.rel target = $region3
    $region8: #{npu_mnist_forward.3} parent=1 // loop_exit
      _

// kernel: npu_mnist_forward.4
$region0: #{npu_mnist_forward.4}
  #allocation0 [shape = 'u32[]', space=smem, size = 0x4, offset = 0x4, fixed_abs, tag = 'smem constant byte address 0x4 - core index']
  #allocation1 [shape = 'u32[72,128]{1,0:T(1,128)}', space=vmem, size = 0x9000, scoped, tag = 'internal scratch']
  %s0 = inlined_call_operand.vmem [shape: bf16[4,32,256], index: 0, kind: input, shape index: {}]
  %s1 = inlined_call_operand.vmem [shape: bf16[256,20], index: 1, kind: input, shape index: {}]
  %s2 = inlined_call_operand.vmem [shape: f32[1,20], index: 2, kind: input, shape index: {}]
  %s3 = inlined_call_operand.vmem [shape: bf16[32,20], index: 3, kind: output, shape index: {}]
  %s4 = sld [smem:[#allocation0]]
  $region83: #{npu_mnist_forward.4} parent=0
    _
  %s6 = ssub.s32 1, %s4
  %s7 = scalar_select 0, %s6, %s4
  $region1: #{npu_mnist_forward.4} parent=0
    #allocation2 [shape = 'u8[65536]{0}', space=vmem, size = 0x10000, scoped, tag = 'input window, operand 0']
    loop: start=0, step=1, limit=4
    $region2: #{npu_mnist_forward.4} parent=1 // loop_pre_header
      _
    $region3: #{npu_mnist_forward.4} parent=1 // loop_header
      %s9 = sphi 0, %s13
      %p10 = scmp.ge.s32.totalorder %s9, 4
      %s19 = sphi 0, %s21
      %s22 = sphi 0, %s19
      %s23 = sphi 0, %s22
      %s39 = sphi 0, %s23
      %s43 = sphi 0, %s43
      %s45 = sphi 0, %s43
      %s46 = sphi 0, %s45
      %s60 = sphi 0, %s46
      %s64 = sphi 0, %s64
      %s66 = sphi 0, %s64
      %s67 = sphi 0, %s66
      %s81 = sphi 0, %s67
      %s87 = sphi 0, %s89
      %s90 = sphi 0, %s87
      %s91 = sphi 0, %s90
      %s107 = sphi 0, %s91
    $region4: #{npu_mnist_forward.4} parent=1 // loop_header_branch
      %12 = sbr.rel (%p10) target = $region8
    $region5: #{npu_mnist_forward.4} parent=1 // loop_body
      %s14 = ssub.s32 %s9, 1
      %s15 = ssub.s32 %s9, 2
      %s16 = sadd.s32 %s9, 1
      %s17 = ssub.s32 %s9, %s16
      %p18 = scmp.eq.s32.totalorder %s17, 0
      %s20 = sadd.s32 %s19, 1
      %s21 = scalar_select %p18, %s19, %s20
      %p24 = pneg %p18
      %p25 = scmp.eq.s32.totalorder %s9, 1
      %p26 = por %p24, %p25
      %p27 = scmp.ne.s32.totalorder %s19, %s22
      %p28 = scmp.eq.s32.totalorder %s9, 0
      %p29 = por %p27, %p28
      %p30 = scmp.ne.s32.totalorder %s19, %s22
      %p31 = scmp.eq.s32.totalorder %s14, 1
      %p32 = por %p30, %p31
      %p33 = scmp.ne.s32.totalorder %s22, %s23
      %p34 = scmp.eq.s32.totalorder %s14, 0
      %p35 = por %p33, %p34
      %p36 = scmp.ne.s32.totalorder %s22, %s23
      %p37 = scmp.eq.s32.totalorder %s15, 1
      %p38 = por %p36, %p37
      %p40 = scmp.ne.s32.totalorder %s23, %s39
      %p41 = scmp.eq.s32.totalorder %s15, 0
      %p42 = por %p40, %p41
      %s44 = sadd.s32 %s43, 1
      %p47 = scmp.eq.s32.totalorder %s9, 1
      %p48 = scmp.ne.s32.totalorder %s43, %s45
      %p49 = scmp.eq.s32.totalorder %s9, 0
      %p50 = por %p48, %p49
      %p51 = scmp.ne.s32.totalorder %s43, %s45
      %p52 = scmp.eq.s32.totalorder %s14, 1
      %p53 = por %p51, %p52
      %p54 = scmp.ne.s32.totalorder %s45, %s46
      %p55 = scmp.eq.s32.totalorder %s14, 0
      %p56 = por %p54, %p55
      %p57 = scmp.ne.s32.totalorder %s45, %s46
      %p58 = scmp.eq.s32.totalorder %s15, 1
      %p59 = por %p57, %p58
      %p61 = scmp.ne.s32.totalorder %s46, %s60
      %p62 = scmp.eq.s32.totalorder %s15, 0
      %p63 = por %p61, %p62
      %s65 = sadd.s32 %s64, 1
      %p68 = scmp.eq.s32.totalorder %s9, 1
      %p69 = scmp.ne.s32.totalorder %s64, %s66
      %p70 = scmp.eq.s32.totalorder %s9, 0
      %p71 = por %p69, %p70
      %p72 = scmp.ne.s32.totalorder %s64, %s66
      %p73 = scmp.eq.s32.totalorder %s14, 1
      %p74 = por %p72, %p73
      %p75 = scmp.ne.s32.totalorder %s66, %s67
      %p76 = scmp.eq.s32.totalorder %s14, 0
      %p77 = por %p75, %p76
      %p78 = scmp.ne.s32.totalorder %s66, %s67
      %p79 = scmp.eq.s32.totalorder %s15, 1
      %p80 = por %p78, %p79
      %p82 = scmp.ne.s32.totalorder %s67, %s81
      %p83 = scmp.eq.s32.totalorder %s15, 0
      %p84 = por %p82, %p83
      %s85 = ssub.s32 %s9, %s16
      %p86 = scmp.eq.s32.totalorder %s85, 0
      %s88 = sadd.s32 %s87, 1
      %s89 = scalar_select %p86, %s87, %s88
      %p92 = pneg %p86
      %p93 = scmp.eq.s32.totalorder %s9, 1
      %p94 = por %p92, %p93
      %p95 = scmp.ne.s32.totalorder %s87, %s90
      %p96 = scmp.eq.s32.totalorder %s9, 0
      %p97 = por %p95, %p96
      %p98 = scmp.ne.s32.totalorder %s87, %s90
      %p99 = scmp.eq.s32.totalorder %s14, 1
      %p100 = por %p98, %p99
      %p101 = scmp.ne.s32.totalorder %s90, %s91
      %p102 = scmp.eq.s32.totalorder %s14, 0
      %p103 = por %p101, %p102
      %p104 = scmp.ne.s32.totalorder %s90, %s91
      %p105 = scmp.eq.s32.totalorder %s15, 1
      %p106 = por %p104, %p105
      %p108 = scmp.ne.s32.totalorder %s91, %s107
      %p109 = scmp.eq.s32.totalorder %s15, 0
      %p110 = por %p108, %p109
      %p111 = scmp.le.s32.totalorder 1, %s9
      %p112 = scmp.lt.s32.totalorder %s9, 3
      %p113 = pnand %p111, %p112
      %p114 = pneg %p113
      // Predicated region
      $region9: #{npu_mnist_forward.4} parent=5 // pred_check
        _
      $region10: #{npu_mnist_forward.4} parent=5 // pred_check_branch
        %116 = sbr.rel (%p113) target = $region12
      $region11: #{npu_mnist_forward.4} parent=5 // pred_region
        %s117 = ssub.s32 %s9, 1
        // Predicated region
        $region13: #{npu_mnist_forward.4} parent=11 // pred_check
          %p118 = pneg %p56
        $region14: #{npu_mnist_forward.4} parent=11 // pred_check_branch
          %120 = sbr.rel (%p118) target = $region16
        $region15: #{npu_mnist_forward.4} parent=11 // pred_region
          _
        $region16: #{npu_mnist_forward.4} parent=11 // pred_fallthru
          _
        // Predicated region
        $region17: #{npu_mnist_forward.4} parent=11 // pred_check
          %p121 = pneg %p77
        $region18: #{npu_mnist_forward.4} parent=11 // pred_check_branch
          %123 = sbr.rel (%p121) target = $region20
        $region19: #{npu_mnist_forward.4} parent=11 // pred_region
          _
        $region20: #{npu_mnist_forward.4} parent=11 // pred_fallthru
          _
      $region12: #{npu_mnist_forward.4} parent=5 // pred_fallthru
        _
      %p124 = scmp.lt.s32.totalorder %s9, 2
      // Predicated region
      $region21: #{npu_mnist_forward.4} parent=5 // pred_check
        %p125 = pneg %p124
      $region22: #{npu_mnist_forward.4} parent=5 // pred_check_branch
        %127 = sbr.rel (%p125) target = $region24
      $region23: #{npu_mnist_forward.4} parent=5 // pred_region
        // Predicated region
        $region25: #{npu_mnist_forward.4} parent=23 // pred_check
          %p128 = pneg %p29
        $region26: #{npu_mnist_forward.4} parent=23 // pred_check_branch
          %130 = sbr.rel (%p128) target = $region28
        $region27: #{npu_mnist_forward.4} parent=23 // pred_region
          %s131 = sand.u32 %s19, 1
          %s132 = sand.u32 %s19, 1
          %s133 = smul.addr %s132, 64
          %s134 = scalar_lea.vmem [#allocation2], %s133
          %s135 = smul.u32 2, %s9
          %s136 = smul.addr %s135, 2
          %s137 = smul.addr %s136, 4
          %s138 = scalar_lea.vmem %s0, %s137
          // Predicated region
          $region29: #{npu_mnist_forward.4} parent=27 // pred_check
            _
          $region30: #{npu_mnist_forward.4} parent=27 // pred_check_branch
            %140 = sbr.rel (0) target = $region32
          $region31: #{npu_mnist_forward.4} parent=27 // pred_region
            // Predicated region
            $region33: #{npu_mnist_forward.4} parent=31 // pred_check
              _
            $region34: #{npu_mnist_forward.4} parent=31 // pred_check_branch
              %142 = sbr.rel (0) target = $region36
            $region35: #{npu_mnist_forward.4} parent=31 // pred_region
              // Predicated region
              $region48: #{npu_mnist_forward.4} parent=35 // pred_check
                _
              $region49: #{npu_mnist_forward.4} parent=35 // pred_check_branch
                %172 = sbr.rel (0) target = $region51
              $region50: #{npu_mnist_forward.4} parent=35 // pred_region
                loop: start=0, step=1, limit=1
                $region52: #{npu_mnist_forward.4} parent=50 // loop_pre_header
                  _
                $region53: #{npu_mnist_forward.4} parent=50 // loop_header
                  %s174 = sphi 0, %s178
                  %p175 = scmp.ge.s32.totalorder %s174, 1
                  %s179 = sphi %s138, %s138
                  %s180 = sphi %s134, %s134
                $region54: #{npu_mnist_forward.4} parent=50 // loop_header_branch
                  %177 = sbr.rel (%p175) target = $region58
                $region55: #{npu_mnist_forward.4} parent=50 // loop_body
                  %v181 = vld [vmem:[%s179] sm:$0xff]
                  %182 = vst [vmem:[%s180] sm:$0xff] %v181
                  %v183 = vld [vmem:[%s179 + $0x8] sm:$0xff]
                  %184 = vst [vmem:[%s180 + $0x8] sm:$0xff] %v183
                  %v185 = vld [vmem:[%s179 + $0x20] sm:$0xff]
                  %186 = vst [vmem:[%s180 + $0x10] sm:$0xff] %v185
                  %v187 = vld [vmem:[%s179 + $0x28] sm:$0xff]
                  %188 = vst [vmem:[%s180 + $0x18] sm:$0xff] %v187
                  %v189 = vld [vmem:[%s179 + $0x40] sm:$0xff]
                  %190 = vst [vmem:[%s180 + $0x20] sm:$0xff] %v189
                  %v191 = vld [vmem:[%s179 + $0x48] sm:$0xff]
                  %192 = vst [vmem:[%s180 + $0x28] sm:$0xff] %v191
                  %v193 = vld [vmem:[%s179 + $0x60] sm:$0xff]
                  %194 = vst [vmem:[%s180 + $0x30] sm:$0xff] %v193
                  %v195 = vld [vmem:[%s179 + $0x68] sm:$0xff]
                  %196 = vst [vmem:[%s180 + $0x38] sm:$0xff] %v195
                $region56: #{npu_mnist_forward.4} parent=50 // loop_footer
                  %s178 = sadd.s32 1, %s174
                $region57: #{npu_mnist_forward.4} parent=50 // loop_footer_branch
                  %173 = sbr.rel target = $region53
                $region58: #{npu_mnist_forward.4} parent=50 // loop_exit
                  _
              $region51: #{npu_mnist_forward.4} parent=35 // pred_fallthru
                _
              // Predicated region
              $region59: #{npu_mnist_forward.4} parent=35 // pred_check
                _
              $region60: #{npu_mnist_forward.4} parent=35 // pred_check_branch
                %198 = sbr.rel target = $region62
              $region61: #{npu_mnist_forward.4} parent=35 // pred_region
                _
              $region62: #{npu_mnist_forward.4} parent=35 // pred_fallthru
                _
            $region36: #{npu_mnist_forward.4} parent=31 // pred_fallthru
              _
            // Predicated region
            $region37: #{npu_mnist_forward.4} parent=31 // pred_check
              _
            $region38: #{npu_mnist_forward.4} parent=31 // pred_check_branch
              %144 = sbr.rel target = $region40
            $region39: #{npu_mnist_forward.4} parent=31 // pred_region
              %s146 = ssub.s32 256, 1
              loop: start=0, step=1, limit=1
              $region41: #{npu_mnist_forward.4} parent=39 // loop_pre_header
                _
              $region42: #{npu_mnist_forward.4} parent=39 // loop_header
                %s148 = sphi 0, %s152
                %p149 = scmp.ge.s32.totalorder %s148, 1
                %s153 = sphi %s138, %s138
                %s154 = sphi %s134, %s134
              $region43: #{npu_mnist_forward.4} parent=39 // loop_header_branch
                %151 = sbr.rel (%p149) target = $region47
              $region44: #{npu_mnist_forward.4} parent=39 // loop_body
                %v155 = vld [vmem:[%s153] sm:%s146]
                %156 = vst [vmem:[%s154] sm:%s146] %v155
                %v157 = vld [vmem:[%s153 + $0x8] sm:%s146]
                %158 = vst [vmem:[%s154 + $0x8] sm:%s146] %v157
                %v159 = vld [vmem:[%s153 + $0x20] sm:%s146]
                %160 = vst [vmem:[%s154 + $0x10] sm:%s146] %v159
                %v161 = vld [vmem:[%s153 + $0x28] sm:%s146]
                %162 = vst [vmem:[%s154 + $0x18] sm:%s146] %v161
                %v163 = vld [vmem:[%s153 + $0x40] sm:%s146]
                %164 = vst [vmem:[%s154 + $0x20] sm:%s146] %v163
                %v165 = vld [vmem:[%s153 + $0x48] sm:%s146]
                %166 = vst [vmem:[%s154 + $0x28] sm:%s146] %v165
                %v167 = vld [vmem:[%s153 + $0x60] sm:%s146]
                %168 = vst [vmem:[%s154 + $0x30] sm:%s146] %v167
                %v169 = vld [vmem:[%s153 + $0x68] sm:%s146]
                %170 = vst [vmem:[%s154 + $0x38] sm:%s146] %v169
              $region45: #{npu_mnist_forward.4} parent=39 // loop_footer
                %s152 = sadd.s32 1, %s148
              $region46: #{npu_mnist_forward.4} parent=39 // loop_footer_branch
                %147 = sbr.rel target = $region42
              $region47: #{npu_mnist_forward.4} parent=39 // loop_exit
                _
            $region40: #{npu_mnist_forward.4} parent=31 // pred_fallthru
              _
          $region32: #{npu_mnist_forward.4} parent=27 // pred_fallthru
            _
          %199 = vnop
        $region28: #{npu_mnist_forward.4} parent=23 // pred_fallthru
          _
      $region24: #{npu_mnist_forward.4} parent=5 // pred_fallthru
        _
      %p200 = scmp.le.s32.totalorder 1, %s9
      %p201 = scmp.lt.s32.totalorder %s9, 3
      %p202 = pnand %p200, %p201
      %p203 = pneg %p202
      // Predicated region
      $region63: #{npu_mnist_forward.4} parent=5 // pred_check
        _
      $region64: #{npu_mnist_forward.4} parent=5 // pred_check_branch
        %205 = sbr.rel (%p202) target = $region66
      $region65: #{npu_mnist_forward.4} parent=5 // pred_region
        %s206 = ssub.s32 %s9, 1
        %s207 = sand.u32 %s22, 1
        %s208 = sand.u32 %s22, 1
        %s209 = smul.addr %s208, 64
        %s210 = scalar_lea.vmem [#allocation2], %s209
        // Predicated region
        $region67: #{npu_mnist_forward.4} parent=65 // pred_check
          %p211 = pneg %p35
        $region68: #{npu_mnist_forward.4} parent=65 // pred_check_branch
          %213 = sbr.rel (%p211) target = $region70
        $region69: #{npu_mnist_forward.4} parent=65 // pred_region
          _
        $region70: #{npu_mnist_forward.4} parent=65 // pred_fallthru
          _
        %s214 = sand.u32 %s22, 1
        %s215 = sand.u32 %s22, 1
        %s216 = smul.addr %s215, 64
        %s217 = scalar_lea.vmem [#allocation2], %s216
        %p218 = pneg %p35
        %p219 = pneg %p32
        %p220 = pneg %p56
        %p221 = pneg %p53
        %p222 = pneg %p77
        %p223 = pneg %p74
        %p224 = pneg %p103
        %p225 = pneg %p100
        %s226 = smul.u32 2, %s14
        %p227 = scmp.lt.s32.totalorder %s226, 3
        %s228 = scalar_select %p227, %s226, 3
        %s229 = smul.addr %s228, 4
        %s230 = scalar_lea.vmem %s3, %s229
        %s231 = smul.u32 2, %s14
        %s232 = smul.u32 2, %s14
        %p233 = scmp.lt.s32.totalorder %s232, 3
        %s234 = scalar_select %p233, %s232, 3
        %s235 = smul.addr %s234, 4
        %s236 = scalar_lea.vmem %s3, %s235
        %s237 = smul.u32 2, %s14
        %v238 = vld [vmem:[%s210] sm:$0xff]
        %v239 = vld [vmem:[%s210 + $0x8] sm:$0xff]
        %v240 = vld [vmem:[%s210 + $0x10] sm:$0xff]
        %v241 = vld [vmem:[%s210 + $0x18] sm:$0xff]
        %v242 = vld [vmem:[%s210 + $0x20] sm:$0xff]
        %v243 = vld [vmem:[%s210 + $0x28] sm:$0xff]
        %v244 = vld [vmem:[%s210 + $0x30] sm:$0xff]
        %v245 = vld [vmem:[%s210 + $0x38] sm:$0xff]
        %v246 = vld [vmem:[%s1] sm:$0xf]
        %v247 = vld [vmem:[%s1 + $0x4] sm:$0xf]
        %v248 = vld [vmem:[%s1 + $0x8] sm:$0xf]
        %v249 = vld [vmem:[%s1 + $0xc] sm:$0xf]
        %v250 = vld [vmem:[%s1 + $0x10] sm:$0xf]
        %v251 = vld [vmem:[%s1 + $0x14] sm:$0xf]
        %v252 = vld [vmem:[%s1 + $0x18] sm:$0xf]
        %v253 = vld [vmem:[%s1 + $0x1c] sm:$0xf]
        %v254 = vld [vmem:[%s1 + $0x20] sm:$0xf]
        %v255 = vld [vmem:[%s1 + $0x24] sm:$0xf]
        %v256 = vld [vmem:[%s1 + $0x28] sm:$0xf]
        %v257 = vld [vmem:[%s1 + $0x2c] sm:$0xf]
        %v258 = vld [vmem:[%s1 + $0x30] sm:$0xf]
        %v259 = vld [vmem:[%s1 + $0x34] sm:$0xf]
        %v260 = vld [vmem:[%s1 + $0x38] sm:$0xf]
        %v261 = vld [vmem:[%s1 + $0x3c] sm:$0xf]
        %v262 = vld [vmem:[%s1 + $0x40] sm:$0xf]
        %v263 = vld [vmem:[%s1 + $0x44] sm:$0xf]
        %v264 = vld [vmem:[%s1 + $0x48] sm:$0xf]
        %v265 = vld [vmem:[%s1 + $0x4c] sm:$0xf]
        %v266 = vld [vmem:[%s1 + $0x50] sm:$0xf]
        %v267 = vld [vmem:[%s1 + $0x54] sm:$0xf]
        %v268 = vld [vmem:[%s1 + $0x58] sm:$0xf]
        %v269 = vld [vmem:[%s1 + $0x5c] sm:$0xf]
        %v270 = vld [vmem:[%s1 + $0x60] sm:$0xf]
        %v271 = vld [vmem:[%s1 + $0x64] sm:$0xf]
        %v272 = vld [vmem:[%s1 + $0x68] sm:$0xf]
        %v273 = vld [vmem:[%s1 + $0x6c] sm:$0xf]
        %v274 = vld [vmem:[%s1 + $0x70] sm:$0xf]
        %v275 = vld [vmem:[%s1 + $0x74] sm:$0xf]
        %v276 = vld [vmem:[%s1 + $0x78] sm:$0xf]
        %v277 = vld [vmem:[%s1 + $0x7c] sm:$0xf]
        %v286 = vunpack.c.l.b16 %v238
        %v287 = vunpack.c.h.b16 %v238
        %v288 = vunpack.c.l.b16 %v239
        %v289 = vunpack.c.h.b16 %v239
        %v290 = vunpack.c.l.b16 %v240
        %v291 = vunpack.c.h.b16 %v240
        %v292 = vunpack.c.l.b16 %v241
        %v293 = vunpack.c.h.b16 %v241
        %v294 = vunpack.c.l.b16 %v242
        %v295 = vunpack.c.h.b16 %v242
        %v296 = vunpack.c.l.b16 %v243
        %v297 = vunpack.c.h.b16 %v243
        %v298 = vunpack.c.l.b16 %v244
        %v299 = vunpack.c.h.b16 %v244
        %v300 = vunpack.c.l.b16 %v245
        %v301 = vunpack.c.h.b16 %v245
        %v302 = vpack.c.b16 %v288, %v286
        %v303 = vpack.c.b16 %v289, %v287
        %v304 = vpack.c.b16 %v292, %v290
        %v305 = vpack.c.b16 %v293, %v291
        %v306 = vpack.c.b16 %v296, %v294
        %v307 = vpack.c.b16 %v297, %v295
        %v308 = vpack.c.b16 %v300, %v298
        %v309 = vpack.c.b16 %v301, %v299
        %v350 = vunpack.c.l.b16 %v246
        %v351 = vunpack.c.l.b16 %v247
        %v352 = vunpack.c.l.b16 %v248
        %v353 = vunpack.c.l.b16 %v249
        %v354 = vunpack.c.l.b16 %v250
        %v355 = vunpack.c.l.b16 %v251
        %v356 = vunpack.c.l.b16 %v252
        %v357 = vunpack.c.l.b16 %v253
        %v358 = vunpack.c.l.b16 %v254
        %v359 = vunpack.c.l.b16 %v255
        %v360 = vunpack.c.l.b16 %v256
        %v361 = vunpack.c.l.b16 %v257
        %v362 = vunpack.c.l.b16 %v258
        %v363 = vunpack.c.l.b16 %v259
        %v364 = vunpack.c.l.b16 %v260
        %v365 = vunpack.c.l.b16 %v261
        %v366 = vunpack.c.l.b16 %v262
        %v367 = vunpack.c.l.b16 %v263
        %v368 = vunpack.c.l.b16 %v264
        %v369 = vunpack.c.l.b16 %v265
        %v370 = vunpack.c.l.b16 %v266
        %v371 = vunpack.c.l.b16 %v267
        %v372 = vunpack.c.l.b16 %v268
        %v373 = vunpack.c.l.b16 %v269
        %v374 = vunpack.c.l.b16 %v270
        %v375 = vunpack.c.l.b16 %v271
        %v376 = vunpack.c.l.b16 %v272
        %v377 = vunpack.c.l.b16 %v273
        %v378 = vunpack.c.l.b16 %v274
        %v379 = vunpack.c.l.b16 %v275
        %v380 = vunpack.c.l.b16 %v276
        %v381 = vunpack.c.l.b16 %v277
        %v382 = vpack.c.b16 %v351, %v350
        %v383 = vpack.c.b16 %v353, %v352
        %v384 = vpack.c.b16 %v355, %v354
        %v385 = vpack.c.b16 %v357, %v356
        %v386 = vpack.c.b16 %v359, %v358
        %v387 = vpack.c.b16 %v361, %v360
        %v388 = vpack.c.b16 %v363, %v362
        %v389 = vpack.c.b16 %v365, %v364
        %v390 = vpack.c.b16 %v367, %v366
        %v391 = vpack.c.b16 %v369, %v368
        %v392 = vpack.c.b16 %v371, %v370
        %v393 = vpack.c.b16 %v373, %v372
        %v394 = vpack.c.b16 %v375, %v374
        %v395 = vpack.c.b16 %v377, %v376
        %v396 = vpack.c.b16 %v379, %v378
        %v397 = vpack.c.b16 %v381, %v380
        %414 = vmatpush.bf16.msra.mxu0 %v389
        %415 = vmatpush.bf16.msra.mxu0 %v388
        %416 = vmatpush.bf16.msra.mxu0 %v387
        %417 = vmatpush.bf16.msra.mxu0 %v386
        %418 = vmatpush.bf16.msra.mxu0 %v385
        %419 = vmatpush.bf16.msra.mxu0 %v384
        %420 = vmatpush.bf16.msra.mxu0 %v383
        %421 = vmatpush.bf16.msra.mxu0 %v382
        %422 = vmatmul.bf16.gmra.mxu0 %v302
        %v423 = vpop.f32.mrf.mxu0
        %v424 = vadd.f32 0.0, %v423
        %v425 = vpop.f32.mrf.mxu0
        %v426 = vadd.f32 0.0, %v425
        %427 = vmatmul.bf16.gmra.mxu0 %v304
        %v428 = vpop.f32.mrf.mxu0
        %v429 = vadd.f32 0.0, %v428
        %v430 = vpop.f32.mrf.mxu0
        %v431 = vadd.f32 0.0, %v430
        %432 = vmatmul.bf16.gmra.mxu0 %v306
        %v433 = vpop.f32.mrf.mxu0
        %v434 = vadd.f32 0.0, %v433
        %v435 = vpop.f32.mrf.mxu0
        %v436 = vadd.f32 0.0, %v435
        %437 = vmatmul.bf16.gmra.mxu0 %v308
        %v438 = vpop.f32.mrf.mxu0
        %v439 = vadd.f32 0.0, %v438
        %v440 = vpop.f32.mrf.mxu0
        %v441 = vadd.f32 0.0, %v440
        %442 = vdwg.mxu0
        %443 = vmatpush.bf16.msra.mxu0 %v397
        %444 = vmatpush.bf16.msra.mxu0 %v396
        %445 = vmatpush.bf16.msra.mxu0 %v395
        %446 = vmatpush.bf16.msra.mxu0 %v394
        %447 = vmatpush.bf16.msra.mxu0 %v393
        %448 = vmatpush.bf16.msra.mxu0 %v392
        %449 = vmatpush.bf16.msra.mxu0 %v391
        %450 = vmatpush.bf16.msra.mxu0 %v390
        %451 = vmatmul.bf16.gmra.mxu0 %v303
        %v452 = vpop.f32.mrf.mxu0
        %v453 = vadd.f32 %v424, %v452
        %v454 = vpop.f32.mrf.mxu0
        %v455 = vadd.f32 %v426, %v454
        %456 = vmatmul.bf16.gmra.mxu0 %v305
        %v457 = vpop.f32.mrf.mxu0
        %v458 = vadd.f32 %v429, %v457
        %v459 = vpop.f32.mrf.mxu0
        %v460 = vadd.f32 %v431, %v459
        %461 = vmatmul.bf16.gmra.mxu0 %v307
        %v462 = vpop.f32.mrf.mxu0
        %v463 = vadd.f32 %v434, %v462
        %v464 = vpop.f32.mrf.mxu0
        %v465 = vadd.f32 %v436, %v464
        %466 = vmatmul.bf16.gmra.mxu0 %v309
        %v467 = vpop.f32.mrf.mxu0
        %v468 = vadd.f32 %v439, %v467
        %v469 = vpop.f32.mrf.mxu0
        %v470 = vadd.f32 %v441, %v469
        %471 = vdwg.mxu0
        %vm472 = vcmask 162816
        %v473 = vsel %vm472, %v453, -inf
        %v474 = vsel %vm472, %v458, -inf
        %v475 = vsel %vm472, %v463, -inf
        %v476 = vmax.f32 %v473, %v475
        %v477 = vsel %vm472, %v468, -inf
        %v478 = vmax.f32 %v474, %v477
        %v479 = vmax.f32 %v476, %v478
        %v480 = vsel %vm472, %v455, -inf
        %v481 = vsel %vm472, %v460, -inf
        %v482 = vsel %vm472, %v465, -inf
        %v483 = vmax.f32 %v480, %v482
        %v484 = vsel %vm472, %v470, -inf
        %v485 = vmax.f32 %v481, %v484
        %v486 = vmax.f32 %v483, %v485
        %v487 = vld [vmem:[%s2] sm:$0x1]
        %v489 = vperm.slane %v487, 0
        %v491 = vadd.f32 %v479, %v489
        %v492 = vadd.f32 %v486, %v489
        %v493 = vmax.f32 %v491, 0.0
        %v494 = vmax.f32 %v492, 0.0
        %v495 = vpack.c.bf16 %v493, %v493
        %v496 = vpack.c.bf16 %v494, %v494
        %vm497 = vcmask 158720
        %498 = vst.msk [vmem:[%s236] sm:$0xf] %vm497, %v495
        %499 = vst.msk [vmem:[%s236 + $0x4] sm:$0xf] %vm497, %v496
        %s500 = smul.u32 2, %s14
        %p501 = scmp.lt.s32.totalorder %s500, 3
        %s502 = scalar_select %p501, %s500, 3
        %s503 = smul.addr %s502, 4
        %s504 = scalar_lea.vmem %s3, %s503
        // Predicated region
        $region71: #{npu_mnist_forward.4} parent=65 // pred_check
          %p505 = pneg %p100
        $region72: #{npu_mnist_forward.4} parent=65 // pred_check_branch
          %507 = sbr.rel (%p505) target = $region74
        $region73: #{npu_mnist_forward.4} parent=65 // pred_region
          %s508 = smul.u32 2, %s14
        $region74: #{npu_mnist_forward.4} parent=65 // pred_fallthru
          _
      $region66: #{npu_mnist_forward.4} parent=5 // pred_fallthru
        _
      %p509 = scmp.le.s32.totalorder 2, %s9
      // Predicated region
      $region75: #{npu_mnist_forward.4} parent=5 // pred_check
        %p510 = pneg %p509
      $region76: #{npu_mnist_forward.4} parent=5 // pred_check_branch
        %512 = sbr.rel (%p510) target = $region78
      $region77: #{npu_mnist_forward.4} parent=5 // pred_region
        %s513 = ssub.s32 %s9, 2
        // Predicated region
        $region79: #{npu_mnist_forward.4} parent=77 // pred_check
          %p514 = pneg %p106
        $region80: #{npu_mnist_forward.4} parent=77 // pred_check_branch
          %516 = sbr.rel (%p514) target = $region82
        $region81: #{npu_mnist_forward.4} parent=77 // pred_region
          %s517 = smul.u32 2, %s15
          %p518 = scmp.lt.s32.totalorder %s517, 3
          %s519 = scalar_select %p518, %s517, 3
          %s520 = smul.addr %s519, 4
          %s521 = scalar_lea.vmem %s3, %s520
        $region82: #{npu_mnist_forward.4} parent=77 // pred_fallthru
          _
      $region78: #{npu_mnist_forward.4} parent=5 // pred_fallthru
        _
    $region6: #{npu_mnist_forward.4} parent=1 // loop_footer
      %s13 = sadd.s32 1, %s9
    $region7: #{npu_mnist_forward.4} parent=1 // loop_footer_branch
      %8 = sbr.rel target = $region3
    $region8: #{npu_mnist_forward.4} parent=1 // loop_exit
      _

// kernel: npu_mnist_forward.5
$region0: #{npu_mnist_forward.5}
  #allocation0 [shape = 'u32[]', space=smem, size = 0x4, offset = 0x4, fixed_abs, tag = 'smem constant byte address 0x4 - core index']
  #allocation1 [shape = 'u32[72,128]{1,0:T(1,128)}', space=vmem, size = 0x9000, scoped, tag = 'internal scratch']
  %s0 = inlined_call_operand.vmem [shape: bf16[2,320], index: 0, kind: input, shape index: {}]
  %s1 = inlined_call_operand.vmem [shape: bf16[320,64], index: 1, kind: input, shape index: {}]
  %s2 = inlined_call_operand.vmem [shape: f32[1,64], index: 2, kind: input, shape index: {}]
  %s3 = inlined_call_operand.vmem [shape: bf16[64,10], index: 3, kind: input, shape index: {}]
  %s4 = inlined_call_operand.vmem [shape: f32[1,10], index: 4, kind: input, shape index: {}]
  %s5 = inlined_call_operand.hbm [shape: f32[2,10], index: 5, kind: output, shape index: {}]
  %s6 = sld [smem:[#allocation0]]
  $region30: #{npu_mnist_forward.5} parent=0
    _
  %s8 = ssub.s32 1, %s6
  %s9 = scalar_select 0, %s8, %s6
  $region1: #{npu_mnist_forward.5} parent=0
    #allocation2 [shape = 'u8[1024]{0}', space=vmem, size = 0x400, scoped, tag = 'output window, operand 0, single buffered']
    #allocation3 [shape = 's32[1]{0}', space=sflag, size = 0x4, scoped, tag = 'scoped memory for npu_mnist_forward.5']
    %10 = vsyncpa [#allocation3], 0
    // Predicated region
    $region2: #{npu_mnist_forward.5} parent=1 // pred_check
      _
    $region3: #{npu_mnist_forward.5} parent=1 // pred_check_branch
      %12 = sbr.rel (0) target = $region5
    $region4: #{npu_mnist_forward.5} parent=1 // pred_region
      _
    $region5: #{npu_mnist_forward.5} parent=1 // pred_fallthru
      _
    // Predicated region
    $region6: #{npu_mnist_forward.5} parent=1 // pred_check
      _
    $region7: #{npu_mnist_forward.5} parent=1 // pred_check_branch
      %14 = sbr.rel (0) target = $region9
    $region8: #{npu_mnist_forward.5} parent=1 // pred_region
      _
    $region9: #{npu_mnist_forward.5} parent=1 // pred_fallthru
      _
    // Predicated region
    $region10: #{npu_mnist_forward.5} parent=1 // pred_check
      _
    $region11: #{npu_mnist_forward.5} parent=1 // pred_check_branch
      %16 = sbr.rel (0) target = $region13
    $region12: #{npu_mnist_forward.5} parent=1 // pred_region
      _
    $region13: #{npu_mnist_forward.5} parent=1 // pred_fallthru
      _
    // Predicated region
    $region14: #{npu_mnist_forward.5} parent=1 // pred_check
      _
    $region15: #{npu_mnist_forward.5} parent=1 // pred_check_branch
      %18 = sbr.rel (0) target = $region17
    $region16: #{npu_mnist_forward.5} parent=1 // pred_region
      _
    $region17: #{npu_mnist_forward.5} parent=1 // pred_fallthru
      _
    // Predicated region
    $region18: #{npu_mnist_forward.5} parent=1 // pred_check
      _
    $region19: #{npu_mnist_forward.5} parent=1 // pred_check_branch
      %20 = sbr.rel (0) target = $region21
    $region20: #{npu_mnist_forward.5} parent=1 // pred_region
      _
    $region21: #{npu_mnist_forward.5} parent=1 // pred_fallthru
      _
    %v22 = vld [vmem:[%s0] sm:$0x7]
    %v23 = vld [vmem:[%s1] sm:$0xf]
    %v24 = vld [vmem:[%s1 + $0x4] sm:$0xf]
    %v25 = vld [vmem:[%s1 + $0x8] sm:$0xf]
    %v26 = vld [vmem:[%s1 + $0xc] sm:$0xf]
    %v27 = vld [vmem:[%s1 + $0x10] sm:$0xf]
    %v28 = vld [vmem:[%s1 + $0x14] sm:$0xf]
    %v29 = vld [vmem:[%s1 + $0x18] sm:$0xf]
    %v30 = vld [vmem:[%s1 + $0x1c] sm:$0xf]
    %v31 = vld [vmem:[%s1 + $0x20] sm:$0xf]
    %v32 = vld [vmem:[%s1 + $0x24] sm:$0xf]
    %v33 = vld [vmem:[%s1 + $0x28] sm:$0xf]
    %v34 = vld [vmem:[%s1 + $0x2c] sm:$0xf]
    %v35 = vld [vmem:[%s1 + $0x30] sm:$0xf]
    %v36 = vld [vmem:[%s1 + $0x34] sm:$0xf]
    %v37 = vld [vmem:[%s1 + $0x38] sm:$0xf]
    %v38 = vld [vmem:[%s1 + $0x3c] sm:$0xf]
    %v39 = vld [vmem:[%s1 + $0x40] sm:$0xf]
    %v40 = vld [vmem:[%s1 + $0x44] sm:$0xf]
    %v41 = vld [vmem:[%s1 + $0x48] sm:$0xf]
    %v42 = vld [vmem:[%s1 + $0x4c] sm:$0xf]
    %v43 = vld [vmem:[%s1 + $0x50] sm:$0xf]
    %v44 = vld [vmem:[%s1 + $0x54] sm:$0xf]
    %v45 = vld [vmem:[%s1 + $0x58] sm:$0xf]
    %v46 = vld [vmem:[%s1 + $0x5c] sm:$0xf]
    %v47 = vld [vmem:[%s1 + $0x60] sm:$0xf]
    %v48 = vld [vmem:[%s1 + $0x64] sm:$0xf]
    %v49 = vld [vmem:[%s1 + $0x68] sm:$0xf]
    %v50 = vld [vmem:[%s1 + $0x6c] sm:$0xf]
    %v51 = vld [vmem:[%s1 + $0x70] sm:$0xf]
    %v52 = vld [vmem:[%s1 + $0x74] sm:$0xf]
    %v53 = vld [vmem:[%s1 + $0x78] sm:$0xf]
    %v54 = vld [vmem:[%s1 + $0x7c] sm:$0xf]
    %v55 = vld [vmem:[%s1 + $0x80] sm:$0xf]
    %v56 = vld [vmem:[%s1 + $0x84] sm:$0xf]
    %v57 = vld [vmem:[%s1 + $0x88] sm:$0xf]
    %v58 = vld [vmem:[%s1 + $0x8c] sm:$0xf]
    %v59 = vld [vmem:[%s1 + $0x90] sm:$0xf]
    %v60 = vld [vmem:[%s1 + $0x94] sm:$0xf]
    %v61 = vld [vmem:[%s1 + $0x98] sm:$0xf]
    %v62 = vld [vmem:[%s1 + $0x9c] sm:$0xf]
    %v63 = vld [vmem:[%s2] sm:$0x1]
    %v65 = vperm.slane %v63, 0
    %68 = vst [vmem:[#allocation1] ss:$9 sm:$0xff] %v22
    %v69 = vld [vmem:[#allocation1] sm:$0xff]
    %v70 = vld [vmem:[#allocation1 + $0x9] sm:$0xff]
    %v71 = vld [vmem:[#allocation1 + $0x12] sm:$0xff]
    %v114 = vunpack.c.l.b16 %v23
    %v115 = vunpack.c.l.b16 %v24
    %v116 = vunpack.c.l.b16 %v25
    %v117 = vunpack.c.l.b16 %v26
    %v118 = vunpack.c.l.b16 %v27
    %v119 = vunpack.c.l.b16 %v28
    %v120 = vunpack.c.l.b16 %v29
    %v121 = vunpack.c.l.b16 %v30
    %v122 = vunpack.c.l.b16 %v31
    %v123 = vunpack.c.l.b16 %v32
    %v124 = vunpack.c.l.b16 %v33
    %v125 = vunpack.c.l.b16 %v34
    %v126 = vunpack.c.l.b16 %v35
    %v127 = vunpack.c.l.b16 %v36
    %v128 = vunpack.c.l.b16 %v37
    %v129 = vunpack.c.l.b16 %v38
    %v130 = vunpack.c.l.b16 %v39
    %v131 = vunpack.c.l.b16 %v40
    %v132 = vunpack.c.l.b16 %v41
    %v133 = vunpack.c.l.b16 %v42
    %v134 = vunpack.c.l.b16 %v43
    %v135 = vunpack.c.l.b16 %v44
    %v136 = vunpack.c.l.b16 %v45
    %v137 = vunpack.c.l.b16 %v46
    %v138 = vunpack.c.l.b16 %v47
    %v139 = vunpack.c.l.b16 %v48
    %v140 = vunpack.c.l.b16 %v49
    %v141 = vunpack.c.l.b16 %v50
    %v142 = vunpack.c.l.b16 %v51
    %v143 = vunpack.c.l.b16 %v52
    %v144 = vunpack.c.l.b16 %v53
    %v145 = vunpack.c.l.b16 %v54
    %v146 = vunpack.c.l.b16 %v55
    %v147 = vunpack.c.l.b16 %v56
    %v148 = vunpack.c.l.b16 %v57
    %v149 = vunpack.c.l.b16 %v58
    %v150 = vunpack.c.l.b16 %v59
    %v151 = vunpack.c.l.b16 %v60
    %v152 = vunpack.c.l.b16 %v61
    %v153 = vunpack.c.l.b16 %v62
    %v154 = vpack.c.b16 %v115, %v114
    %v155 = vpack.c.b16 %v117, %v116
    %v156 = vpack.c.b16 %v119, %v118
    %v157 = vpack.c.b16 %v121, %v120
    %v158 = vpack.c.b16 %v123, %v122
    %v159 = vpack.c.b16 %v125, %v124
    %v160 = vpack.c.b16 %v127, %v126
    %v161 = vpack.c.b16 %v129, %v128
    %v162 = vpack.c.b16 %v131, %v130
    %v163 = vpack.c.b16 %v133, %v132
    %v164 = vpack.c.b16 %v135, %v134
    %v165 = vpack.c.b16 %v137, %v136
    %v166 = vpack.c.b16 %v139, %v138
    %v167 = vpack.c.b16 %v141, %v140
    %v168 = vpack.c.b16 %v143, %v142
    %v169 = vpack.c.b16 %v145, %v144
    %v170 = vpack.c.b16 %v147, %v146
    %v171 = vpack.c.b16 %v149, %v148
    %v172 = vpack.c.b16 %v151, %v150
    %v173 = vpack.c.b16 %v153, %v152
    %vm194 = vcmask 523264
    %v195 = vsel %vm194, %v71, 0
    %197 = vmatpush.bf16.msra.mxu0 %v161
    %198 = vmatpush.bf16.msra.mxu0 %v160
    %199 = vmatpush.bf16.msra.mxu0 %v159
    %200 = vmatpush.bf16.msra.mxu0 %v158
    %201 = vmatpush.bf16.msra.mxu0 %v157
    %202 = vmatpush.bf16.msra.mxu0 %v156
    %203 = vmatpush.bf16.msra.mxu0 %v155
    %204 = vmatpush.bf16.msra.mxu0 %v154
    %205 = vmatmul.bf16.gmra.mxu0 %v69
    %v206 = vpop.f32.mrf.mxu0
    %v207 = vadd.f32 %v65, %v206
    %v208 = vpop.f32.mrf.mxu0
    %209 = vdwg.mxu0
    %210 = vmatpush.bf16.msra.mxu0 %v169
    %211 = vmatpush.bf16.msra.mxu0 %v168
    %212 = vmatpush.bf16.msra.mxu0 %v167
    %213 = vmatpush.bf16.msra.mxu0 %v166
    %214 = vmatpush.bf16.msra.mxu0 %v165
    %215 = vmatpush.bf16.msra.mxu0 %v164
    %216 = vmatpush.bf16.msra.mxu0 %v163
    %217 = vmatpush.bf16.msra.mxu0 %v162
    %218 = vmatmul.bf16.gmra.mxu0 %v70
    %v219 = vpop.f32.mrf.mxu0
    %v220 = vadd.f32 %v207, %v219
    %v221 = vpop.f32.mrf.mxu0
    %222 = vdwg.mxu0
    %223 = vmatpush.bf16.msra.mxu0 0
    %224 = vmatpush.bf16.msra.mxu0 0
    %225 = vmatpush.bf16.msra.mxu0 0
    %226 = vmatpush.bf16.msra.mxu0 0
    %227 = vmatpush.bf16.msra.mxu0 %v173
    %228 = vmatpush.bf16.msra.mxu0 %v172
    %229 = vmatpush.bf16.msra.mxu0 %v171
    %230 = vmatpush.bf16.msra.mxu0 %v170
    %231 = vmatmul.bf16.gmra.mxu0 %v195
    %v232 = vpop.f32.mrf.mxu0
    %v233 = vadd.f32 %v220, %v232
    %v234 = vpop.f32.mrf.mxu0
    %235 = vdwg.mxu0
    %v236 = vmax.f32 %v233, 0.0
    %v237 = vpack.c.bf16 %v236, %v236
    %v238 = vld [vmem:[%s3] sm:$0xf]
    %v239 = vld [vmem:[%s3 + $0x4] sm:$0xf]
    %v240 = vld [vmem:[%s3 + $0x8] sm:$0xf]
    %v241 = vld [vmem:[%s3 + $0xc] sm:$0xf]
    %v242 = vld [vmem:[%s3 + $0x10] sm:$0xf]
    %v243 = vld [vmem:[%s3 + $0x14] sm:$0xf]
    %v244 = vld [vmem:[%s3 + $0x18] sm:$0xf]
    %v245 = vld [vmem:[%s3 + $0x1c] sm:$0xf]
    %v246 = vld [vmem:[%s4] sm:$0x1]
    %v248 = vperm.slane %v246, 0
    %v258 = vunpack.c.l.b16 %v238
    %v259 = vunpack.c.l.b16 %v239
    %v260 = vunpack.c.l.b16 %v240
    %v261 = vunpack.c.l.b16 %v241
    %v262 = vunpack.c.l.b16 %v242
    %v263 = vunpack.c.l.b16 %v243
    %v264 = vunpack.c.l.b16 %v244
    %v265 = vunpack.c.l.b16 %v245
    %v266 = vpack.c.b16 %v259, %v258
    %v267 = vpack.c.b16 %v261, %v260
    %v268 = vpack.c.b16 %v263, %v262
    %v269 = vpack.c.b16 %v265, %v264
    %v275 = vsel %vm194, %v237, 0
    %277 = vmatpush.bf16.msra.mxu0 0
    %278 = vmatpush.bf16.msra.mxu0 0
    %279 = vmatpush.bf16.msra.mxu0 0
    %280 = vmatpush.bf16.msra.mxu0 0
    %281 = vmatpush.bf16.msra.mxu0 %v269
    %282 = vmatpush.bf16.msra.mxu0 %v268
    %283 = vmatpush.bf16.msra.mxu0 %v267
    %284 = vmatpush.bf16.msra.mxu0 %v266
    %285 = vmatmul.bf16.gmra.mxu0 %v275
    %v286 = vpop.f32.mrf.mxu0
    %v287 = vadd.f32 %v248, %v286
    %v288 = vpop.f32.mrf.mxu0
    %289 = vdwg.mxu0
    %vm290 = vcmask 74752
    %v291 = vsel %vm290, %v287, -inf
    %292 = vmax.xlane.f32.xlu0 %v291
    %v293 = vpop.xlane.xlu0 %292
    %v294 = vsub.f32 %v287, %v293
    %v295 = vmul.f32 %v294, 1.442695
    %v296 = vpow.pop %v295
    %v297 = vsel %vm290, %v296, 0.0
    %298 = vadd.xlane.f32.xlu0 %v297
    %v299 = vpop.xlane.xlu0 %298
    %v300 = vlog2.pop %v299
    %v301 = vmul.f32 %v300, 0.6931472
    %v302 = vsub.f32 %v294, %v301
    %303 = vst.msk [vmem:[#allocation2] sm:$0x3] %vm290, %v302
    // Predicated region
    $region22: #{npu_mnist_forward.5} parent=1 // pred_check
      _
    $region23: #{npu_mnist_forward.5} parent=1 // pred_check_branch
      %305 = sbr.rel (0) target = $region25
    $region24: #{npu_mnist_forward.5} parent=1 // pred_region
      %307 = vsyncadd [#allocation3], 0
      %s309 = sshll.u32 [#allocation2], 4
      %s310 = int_to_ptr.vmem [resolvable:$true] %s309
      %s311 = sshll.u32 %s5, 4
      %s312 = int_to_ptr.hbm [resolvable:$true] %s311
      %314 = dma.vmem_to_hbm [thread:$0]  %s310, 32, %s312, [#allocation3]
    $region25: #{npu_mnist_forward.5} parent=1 // pred_fallthru
      _
    // Predicated region
    $region26: #{npu_mnist_forward.5} parent=1 // pred_check
      _
    $region27: #{npu_mnist_forward.5} parent=1 // pred_check_branch
      %316 = sbr.rel (0) target = $region29
    $region28: #{npu_mnist_forward.5} parent=1 // pred_region
      %318 = dma.done [#allocation3], 32
    $region29: #{npu_mnist_forward.5} parent=1 // pred_fallthru
      _
    %319 = vsyncpa [#allocation3], 1

</llo_original>
